<compile_context>
chip_gen: v7x
topology: tpu7x:2x2x1
jax: 0.10.0
libtpu: 0.0.40
codegen_flags: <defaults>
</compile_context>

<pallas_src>
import jax
import jax.numpy as jnp
from jax import lax
from jax.experimental import pallas as pl
from jax.experimental.pallas import tpu as pltpu


def _make_kernel(num_layers, N, H, Bt):
    """Kernel processing one block of `Bt` batch elements per grid step.

    Inputs are pre-arranged node-major:
      A_ref : (Bt*N, Bt*N)  block adjacency, A_ref[n*Bt+b, m*Bt+b] = A[b, n, m]
      X_ref : (Bt*N, F)     X_ref[n*Bt+b] = X[b, n]
    Output:
      outs_ref : (N, Bt, H) per-step RNN hidden states (seq-first).
    """

    def kernel(A_ref, X_ref, *refs):
        nw = 2 * num_layers + 3               # GCN W/b pairs + Wih, Whh, brnn
        wrefs = refs[:nw]
        outs_ref = refs[nw]                   # (N, Bt, H)

        gcn_w = wrefs[: 2 * num_layers]
        Wih_ref, Whh_ref, brnn_ref = wrefs[2 * num_layers:]

        A_bd = A_ref[...]                     # (Bt*N, Bt*N)
        h = X_ref[...]                        # (Bt*N, F) node-major

        # --- GCN stack: h = relu((A @ h) @ W_l + b_l), all 2D matmuls ---
        for l in range(num_layers):
            W = gcn_w[2 * l][...]             # (Fin, H)
            b = gcn_w[2 * l + 1][...]         # (1, H)
            ah = jnp.dot(A_bd, h, preferred_element_type=jnp.float32)
            h = jnp.maximum(
                jnp.dot(ah, W, preferred_element_type=jnp.float32) + b, 0.0
            )

        # --- RNN input projection: one 2D matmul, off the serial path ---
        xw_flat = (
            jnp.dot(h, Wih_ref[...], preferred_element_type=jnp.float32)
            + brnn_ref[...]
        )                                     # (Bt*N, H) node-major
        xw = xw_flat.reshape(N, Bt, H)        # tile-aligned split (Bt % 8 == 0)

        Whh = Whh_ref[...]                    # (H, H)

        # --- statically-unrolled single-layer tanh RNN with (Bt, H) state ---
        state = jnp.zeros((Bt, H), jnp.float32)
        states = []
        for t in range(N):
            # xw[t]: static leading-axis slice -> whole-vreg selection.
            state = jnp.tanh(
                xw[t]
                + jnp.dot(state, Whh, preferred_element_type=jnp.float32)
            )
            states.append(state)

        # single bulk store instead of N narrow per-step stores
        outs_ref[...] = jnp.stack(states, axis=0)

    return kernel


def rgcnet_forward(A, X, params, block_b=None):
    """RGCNet forward. Returns (logits (B,N,2), counts (B,2))."""
    B, N, F = X.shape
    H = params["Wih"].shape[0]
    num_layers = len(params["gcn"]) // 2

    # Default: whole batch in one grid step (single TC on v5e/v6e -> grid
    # steps are pure overhead).  On v7x pass block_b=B//2 to use both TCs.
    Bt = B if block_b is None else min(block_b, B)
    assert B % Bt == 0, "batch must be divisible by the batch block size"
    # Keep the output block's sublane dim (8,128)-friendly.
    assert Bt % 8 == 0 or Bt == B, "block_b must be a multiple of 8 or == B"
    G = B // Bt

    # --- wrapper-side (XLA) data prep: node-major flattening ---
    # Block adjacency: A_bd[g, n*Bt+b, m*Bt+c] = A[g*Bt+b, n, m] * (b == c)
    Ag = A.reshape(G, Bt, N, N)
    eye = jnp.eye(Bt, dtype=A.dtype)
    A_bd = jnp.einsum("gbnm,bc->gnbmc", Ag, eye).reshape(G, N * Bt, N * Bt)
    # Node-major features: X_nm[g, n*Bt+b, :] = X[g*Bt+b, n, :]
    X_nm = X.reshape(G, Bt, N, F).transpose(0, 2, 1, 3).reshape(G, N * Bt, F)

    # Fold the two RNN biases once, outside the kernel.
    brnn = params["bih"] + params["bhh"]
    weight_arrays = list(params["gcn"]) + [params["Wih"], params["Whh"], brnn]

    def full_spec(shape):
        nd = len(shape)
        return pl.BlockSpec(shape, lambda g, nd=nd: (0,) * nd)

    in_specs = [
        pl.BlockSpec((None, N * Bt, N * Bt), lambda g: (g, 0, 0)),   # A_bd
        pl.BlockSpec((None, N * Bt, F), lambda g: (g, 0, 0)),        # X_nm
    ] + [full_spec(w.shape) for w in weight_arrays]

    # Node-major (seq-first) RNN outputs, matching PyTorch's (N, B, H) RNN
    # layout; lane dim is H (dense) — the width-2 heads are applied in XLA.
    out_specs = pl.BlockSpec((N, Bt, H), lambda g: (0, g, 0))
    out_shape = jax.ShapeDtypeStruct((N, B, H), jnp.float32)

    fn = pl.pallas_call(
        _make_kernel(num_layers, N, H, Bt),
        out_shape=out_shape,
        grid_spec=pltpu.PrefetchScalarGridSpec(
            num_scalar_prefetch=0,
            grid=(G,),
            in_specs=in_specs,
            out_specs=out_specs,
        ),
        compiler_params=pltpu.CompilerParams(
            dimension_semantics=("parallel",),
        ),
    )
    outs_nbh = fn(A_bd, X_nm, *weight_arrays)               # (N, B, H)

    # Small (out=2) heads in XLA on the lane-dense kernel output.
    outs = jnp.transpose(outs_nbh, (1, 0, 2))               # (B, N, H)
    final = outs_nbh[-1]                                    # (B, H) last hidden
    logits = outs @ params["Wlog"] + params["blog"]         # (B, N, 2)
    counts = final @ params["Wcnt"] + params["bcnt"]        # (B, 2)
    return logits, counts


def rgcnet_reference(A, X, params):
    """Pure-JAX reference of the same reconstructed forward pass."""
    num_layers = len(params["gcn"]) // 2
    h = X
    for l in range(num_layers):
        W = params["gcn"][2 * l]
        b = params["gcn"][2 * l + 1]
        h = jax.nn.relu(jnp.einsum("bnm,bmf->bnf", A, h) @ W + b)

    B, N, H = h.shape
    Wih, Whh = params["Wih"], params["Whh"]
    bih, bhh = params["bih"], params["bhh"]

    def scan_fn(state, x_t):  # state, x_t: (B, H)
        new = jnp.tanh(x_t @ Wih + bih + state @ Whh + bhh)
        return new, new

    xs = jnp.transpose(h, (1, 0, 2))                 # (N, B, H) seq-first
    final, outs = lax.scan(scan_fn, jnp.zeros((B, H), jnp.float32), xs)
    outs = jnp.transpose(outs, (1, 0, 2))            # (B, N, H)

    logits = outs @ params["Wlog"] + params["blog"]  # (B, N, 2)
    counts = final @ params["Wcnt"] + params["bcnt"] # (B, 2)
    return logits, counts


def init_params(key, input_size, hidden_size, num_layers):
    """Deterministic synthetic parameters.

    Weight matrices are stored already-transposed to (in_features,
    out_features) so the kernel computes x @ W + b (equivalent to PyTorch's
    x @ W.T + b). Biases are stored as (1, out).
    """
    keys = jax.random.split(key, 2 * num_layers + 8)
    kidx = iter(range(len(keys)))
    scale = 0.1

    gcn = []
    fin = input_size
    for _ in range(num_layers):
        gcn.append(scale * jax.random.normal(keys[next(kidx)], (fin, hidden_size), jnp.float32))
        gcn.append(scale * jax.random.normal(keys[next(kidx)], (1, hidden_size), jnp.float32))
        fin = hidden_size

    params = {
        "gcn": gcn,
        "Wih": scale * jax.random.normal(keys[next(kidx)], (hidden_size, hidden_size), jnp.float32),
        "Whh": scale * jax.random.normal(keys[next(kidx)], (hidden_size, hidden_size), jnp.float32),
        "bih": scale * jax.random.normal(keys[next(kidx)], (1, hidden_size), jnp.float32),
        "bhh": scale * jax.random.normal(keys[next(kidx)], (1, hidden_size), jnp.float32),
        "Wlog": scale * jax.random.normal(keys[next(kidx)], (hidden_size, 2), jnp.float32),
        "blog": scale * jax.random.normal(keys[next(kidx)], (1, 2), jnp.float32),
        "Wcnt": scale * jax.random.normal(keys[next(kidx)], (hidden_size, 2), jnp.float32),
        "bcnt": scale * jax.random.normal(keys[next(kidx)], (1, 2), jnp.float32),
    }
    return params


def _make_inputs(key, B, N, input_size):
    k_a, k_x = jax.random.split(key)
    A = jax.random.uniform(k_a, (B, N, N), jnp.float32)
    # symmetrize + self loops, row-normalize (typical GCN adjacency)
    A = 0.5 * (A + jnp.transpose(A, (0, 2, 1))) + jnp.eye(N)[None]
    A = A / A.sum(axis=2, keepdims=True)
    X = jax.random.normal(k_x, (B, N, input_size), jnp.float32)
    return A, X


if __name__ == "__main__":
    B, N = 8, 8                 # batch, number of nodes (= RNN sequence length)
    input_size = 16
    hidden_size = 32
    num_layers = 2

    key = jax.random.PRNGKey(0)
    k_in, k_in2, k_p = jax.random.split(key, 3)

    A, X = _make_inputs(k_in, B, N, input_size)

    # lens as in the PyTorch forward (unused in eval-mode full-length unroll).
    lens = (X != 0).any(axis=2).sum(axis=1)   # TODO(synk): packed-seq handling

    params = init_params(k_p, input_size, hidden_size, num_layers)
    ref_logits, ref_counts = rgcnet_reference(A, X, params)

    # Default: whole batch in a single grid step (best for v5e/v6e single TC).
    logits, counts = rgcnet_forward(A, X, params)
    jax.block_until_ready((logits, counts))
    assert logits.shape == (B, N, 2) and counts.shape == (B, 2)
    assert jnp.allclose(logits, ref_logits, atol=1e-4, rtol=1e-4)
    assert jnp.allclose(counts, ref_counts, atol=1e-4, rtol=1e-4)

    # Batch-blocked parallel grid path (Bt kept a multiple of 8, as on v7x
    # with a larger batch): B=16 split into 2 grid steps of 8.
    B2 = 16
    A2, X2 = _make_inputs(k_in2, B2, N, input_size)
    ref_logits2, ref_counts2 = rgcnet_reference(A2, X2, params)
    logits2, counts2 = rgcnet_forward(A2, X2, params, block_b=8)
    jax.block_until_ready((logits2, counts2))
    assert logits2.shape == (B2, N, 2) and counts2.shape == (B2, 2)
    assert jnp.allclose(logits2, ref_logits2, atol=1e-4, rtol=1e-4)
    assert jnp.allclose(counts2, ref_counts2, atol=1e-4, rtol=1e-4)

    print("KERNEL_OK")
</pallas_src>

<mosaic_0001>
module attributes {stable_mosaic.version = 11 : i64} {
  func.func @kernel(%arg0: i32, %arg1: memref<1x64x64xf32, #tpu.memory_space<vmem>>, %arg2: memref<1x64x16xf32, #tpu.memory_space<vmem>>, %arg3: memref<16x32xf32, #tpu.memory_space<vmem>>, %arg4: memref<1x32xf32, #tpu.memory_space<vmem>>, %arg5: memref<32x32xf32, #tpu.memory_space<vmem>>, %arg6: memref<1x32xf32, #tpu.memory_space<vmem>>, %arg7: memref<32x32xf32, #tpu.memory_space<vmem>>, %arg8: memref<32x32xf32, #tpu.memory_space<vmem>>, %arg9: memref<1x32xf32, #tpu.memory_space<vmem>>, %arg10: memref<8x8x32xf32, #tpu.memory_space<vmem>>) attributes {dimension_semantics = [#tpu.dimension_semantics<parallel>], iteration_bounds = array<i64: 1>, scalar_prefetch = 0 : i64, scratch_operands = 0 : i64, tpu.core_type = #tpu.core_type<tc>, window_params = [{transform_indices = @transform_0, window_bounds = array<i64: 1, 64, 64>}, {transform_indices = @transform_1, window_bounds = array<i64: 1, 64, 16>}, {pipeline_mode = #tpu.pipeline_mode<synchronous>, transform_indices = @transform_2, window_bounds = array<i64: 16, 32>}, {pipeline_mode = #tpu.pipeline_mode<synchronous>, transform_indices = @transform_3, window_bounds = array<i64: 1, 32>}, {pipeline_mode = #tpu.pipeline_mode<synchronous>, transform_indices = @transform_4, window_bounds = array<i64: 32, 32>}, {pipeline_mode = #tpu.pipeline_mode<synchronous>, transform_indices = @transform_5, window_bounds = array<i64: 1, 32>}, {pipeline_mode = #tpu.pipeline_mode<synchronous>, transform_indices = @transform_6, window_bounds = array<i64: 32, 32>}, {pipeline_mode = #tpu.pipeline_mode<synchronous>, transform_indices = @transform_7, window_bounds = array<i64: 32, 32>}, {pipeline_mode = #tpu.pipeline_mode<synchronous>, transform_indices = @transform_8, window_bounds = array<i64: 1, 32>}, {transform_indices = @transform_9, window_bounds = array<i64: 8, 8, 32>}]} {
    %c0 = arith.constant 0 : index
    %c0_0 = arith.constant 0 : index
    %c0_1 = arith.constant 0 : index
    %0 = vector.load %arg1[%c0, %c0_0, %c0_1] : memref<1x64x64xf32, #tpu.memory_space<vmem>>, vector<1x64x64xf32>
    %1 = vector.shape_cast %0 : vector<1x64x64xf32> to vector<64x64xf32>
    %c0_2 = arith.constant 0 : index
    %c0_3 = arith.constant 0 : index
    %c0_4 = arith.constant 0 : index
    %2 = vector.load %arg2[%c0_2, %c0_3, %c0_4] : memref<1x64x16xf32, #tpu.memory_space<vmem>>, vector<1x64x16xf32>
    %3 = vector.shape_cast %2 : vector<1x64x16xf32> to vector<64x16xf32>
    %c0_5 = arith.constant 0 : index
    %c0_6 = arith.constant 0 : index
    %4 = vector.load %arg3[%c0_5, %c0_6] : memref<16x32xf32, #tpu.memory_space<vmem>>, vector<16x32xf32>
    %c0_7 = arith.constant 0 : index
    %c0_8 = arith.constant 0 : index
    %5 = vector.load %arg4[%c0_7, %c0_8] : memref<1x32xf32, #tpu.memory_space<vmem>>, vector<1x32xf32>
    %cst = arith.constant dense<0.000000e+00> : vector<64x16xf32>
    %6 = tpu.matmul %1, %3, %cst {dimension_numbers = #tpu.dot_dimension_numbers<[1], [0], [0], [1], [0, 0, 1, 1], [], []>} : vector<64x64xf32>, vector<64x16xf32>, vector<64x16xf32> -> vector<64x16xf32>
    %cst_9 = arith.constant dense<0.000000e+00> : vector<64x32xf32>
    %7 = tpu.matmul %6, %4, %cst_9 {dimension_numbers = #tpu.dot_dimension_numbers<[1], [0], [0], [1], [0, 0, 1, 1], [], []>} : vector<64x16xf32>, vector<16x32xf32>, vector<64x32xf32> -> vector<64x32xf32>
    %8 = vector.broadcast %5 : vector<1x32xf32> to vector<64x32xf32>
    %9 = arith.addf %7, %8 : vector<64x32xf32>
    %cst_10 = arith.constant 0.000000e+00 : f32
    %10 = vector.broadcast %cst_10 : f32 to vector<64x32xf32>
    %11 = arith.maximumf %9, %10 : vector<64x32xf32>
    %c0_11 = arith.constant 0 : index
    %c0_12 = arith.constant 0 : index
    %12 = vector.load %arg5[%c0_11, %c0_12] : memref<32x32xf32, #tpu.memory_space<vmem>>, vector<32x32xf32>
    %c0_13 = arith.constant 0 : index
    %c0_14 = arith.constant 0 : index
    %13 = vector.load %arg6[%c0_13, %c0_14] : memref<1x32xf32, #tpu.memory_space<vmem>>, vector<1x32xf32>
    %cst_15 = arith.constant dense<0.000000e+00> : vector<64x32xf32>
    %14 = tpu.matmul %1, %11, %cst_15 {dimension_numbers = #tpu.dot_dimension_numbers<[1], [0], [0], [1], [0, 0, 1, 1], [], []>} : vector<64x64xf32>, vector<64x32xf32>, vector<64x32xf32> -> vector<64x32xf32>
    %cst_16 = arith.constant dense<0.000000e+00> : vector<64x32xf32>
    %15 = tpu.matmul %14, %12, %cst_16 {dimension_numbers = #tpu.dot_dimension_numbers<[1], [0], [0], [1], [0, 0, 1, 1], [], []>} : vector<64x32xf32>, vector<32x32xf32>, vector<64x32xf32> -> vector<64x32xf32>
    %16 = vector.broadcast %13 : vector<1x32xf32> to vector<64x32xf32>
    %17 = arith.addf %15, %16 : vector<64x32xf32>
    %cst_17 = arith.constant 0.000000e+00 : f32
    %18 = vector.broadcast %cst_17 : f32 to vector<64x32xf32>
    %19 = arith.maximumf %17, %18 : vector<64x32xf32>
    %c0_18 = arith.constant 0 : index
    %c0_19 = arith.constant 0 : index
    %20 = vector.load %arg7[%c0_18, %c0_19] : memref<32x32xf32, #tpu.memory_space<vmem>>, vector<32x32xf32>
    %cst_20 = arith.constant dense<0.000000e+00> : vector<64x32xf32>
    %21 = tpu.matmul %19, %20, %cst_20 {dimension_numbers = #tpu.dot_dimension_numbers<[1], [0], [0], [1], [0, 0, 1, 1], [], []>} : vector<64x32xf32>, vector<32x32xf32>, vector<64x32xf32> -> vector<64x32xf32>
    %c0_21 = arith.constant 0 : index
    %c0_22 = arith.constant 0 : index
    %22 = vector.load %arg9[%c0_21, %c0_22] : memref<1x32xf32, #tpu.memory_space<vmem>>, vector<1x32xf32>
    %23 = vector.broadcast %22 : vector<1x32xf32> to vector<64x32xf32>
    %24 = arith.addf %21, %23 : vector<64x32xf32>
    %25 = vector.shape_cast %24 : vector<64x32xf32> to vector<8x8x32xf32>
    %c0_23 = arith.constant 0 : index
    %c0_24 = arith.constant 0 : index
    %26 = vector.load %arg8[%c0_23, %c0_24] : memref<32x32xf32, #tpu.memory_space<vmem>>, vector<32x32xf32>
    %cst_25 = arith.constant 0.000000e+00 : f32
    %27 = vector.broadcast %cst_25 : f32 to vector<8x32xf32>
    %28 = vector.extract_strided_slice %25 {offsets = [0, 0, 0], sizes = [1, 8, 32], strides = [1, 1, 1]} : vector<8x8x32xf32> to vector<1x8x32xf32>
    %29 = vector.shape_cast %28 : vector<1x8x32xf32> to vector<8x32xf32>
    %cst_26 = arith.constant dense<0.000000e+00> : vector<8x32xf32>
    %30 = tpu.matmul %27, %26, %cst_26 {dimension_numbers = #tpu.dot_dimension_numbers<[1], [0], [0], [1], [0, 0, 1, 1], [], []>} : vector<8x32xf32>, vector<32x32xf32>, vector<8x32xf32> -> vector<8x32xf32>
    %31 = arith.addf %29, %30 : vector<8x32xf32>
    %32 = math.tanh %31 : vector<8x32xf32>
    %33 = vector.extract_strided_slice %25 {offsets = [1, 0, 0], sizes = [1, 8, 32], strides = [1, 1, 1]} : vector<8x8x32xf32> to vector<1x8x32xf32>
    %34 = vector.shape_cast %33 : vector<1x8x32xf32> to vector<8x32xf32>
    %cst_27 = arith.constant dense<0.000000e+00> : vector<8x32xf32>
    %35 = tpu.matmul %32, %26, %cst_27 {dimension_numbers = #tpu.dot_dimension_numbers<[1], [0], [0], [1], [0, 0, 1, 1], [], []>} : vector<8x32xf32>, vector<32x32xf32>, vector<8x32xf32> -> vector<8x32xf32>
    %36 = arith.addf %34, %35 : vector<8x32xf32>
    %37 = math.tanh %36 : vector<8x32xf32>
    %38 = vector.extract_strided_slice %25 {offsets = [2, 0, 0], sizes = [1, 8, 32], strides = [1, 1, 1]} : vector<8x8x32xf32> to vector<1x8x32xf32>
    %39 = vector.shape_cast %38 : vector<1x8x32xf32> to vector<8x32xf32>
    %cst_28 = arith.constant dense<0.000000e+00> : vector<8x32xf32>
    %40 = tpu.matmul %37, %26, %cst_28 {dimension_numbers = #tpu.dot_dimension_numbers<[1], [0], [0], [1], [0, 0, 1, 1], [], []>} : vector<8x32xf32>, vector<32x32xf32>, vector<8x32xf32> -> vector<8x32xf32>
    %41 = arith.addf %39, %40 : vector<8x32xf32>
    %42 = math.tanh %41 : vector<8x32xf32>
    %43 = vector.extract_strided_slice %25 {offsets = [3, 0, 0], sizes = [1, 8, 32], strides = [1, 1, 1]} : vector<8x8x32xf32> to vector<1x8x32xf32>
    %44 = vector.shape_cast %43 : vector<1x8x32xf32> to vector<8x32xf32>
    %cst_29 = arith.constant dense<0.000000e+00> : vector<8x32xf32>
    %45 = tpu.matmul %42, %26, %cst_29 {dimension_numbers = #tpu.dot_dimension_numbers<[1], [0], [0], [1], [0, 0, 1, 1], [], []>} : vector<8x32xf32>, vector<32x32xf32>, vector<8x32xf32> -> vector<8x32xf32>
    %46 = arith.addf %44, %45 : vector<8x32xf32>
    %47 = math.tanh %46 : vector<8x32xf32>
    %48 = vector.extract_strided_slice %25 {offsets = [4, 0, 0], sizes = [1, 8, 32], strides = [1, 1, 1]} : vector<8x8x32xf32> to vector<1x8x32xf32>
    %49 = vector.shape_cast %48 : vector<1x8x32xf32> to vector<8x32xf32>
    %cst_30 = arith.constant dense<0.000000e+00> : vector<8x32xf32>
    %50 = tpu.matmul %47, %26, %cst_30 {dimension_numbers = #tpu.dot_dimension_numbers<[1], [0], [0], [1], [0, 0, 1, 1], [], []>} : vector<8x32xf32>, vector<32x32xf32>, vector<8x32xf32> -> vector<8x32xf32>
    %51 = arith.addf %49, %50 : vector<8x32xf32>
    %52 = math.tanh %51 : vector<8x32xf32>
    %53 = vector.extract_strided_slice %25 {offsets = [5, 0, 0], sizes = [1, 8, 32], strides = [1, 1, 1]} : vector<8x8x32xf32> to vector<1x8x32xf32>
    %54 = vector.shape_cast %53 : vector<1x8x32xf32> to vector<8x32xf32>
    %cst_31 = arith.constant dense<0.000000e+00> : vector<8x32xf32>
    %55 = tpu.matmul %52, %26, %cst_31 {dimension_numbers = #tpu.dot_dimension_numbers<[1], [0], [0], [1], [0, 0, 1, 1], [], []>} : vector<8x32xf32>, vector<32x32xf32>, vector<8x32xf32> -> vector<8x32xf32>
    %56 = arith.addf %54, %55 : vector<8x32xf32>
    %57 = math.tanh %56 : vector<8x32xf32>
    %58 = vector.extract_strided_slice %25 {offsets = [6, 0, 0], sizes = [1, 8, 32], strides = [1, 1, 1]} : vector<8x8x32xf32> to vector<1x8x32xf32>
    %59 = vector.shape_cast %58 : vector<1x8x32xf32> to vector<8x32xf32>
    %cst_32 = arith.constant dense<0.000000e+00> : vector<8x32xf32>
    %60 = tpu.matmul %57, %26, %cst_32 {dimension_numbers = #tpu.dot_dimension_numbers<[1], [0], [0], [1], [0, 0, 1, 1], [], []>} : vector<8x32xf32>, vector<32x32xf32>, vector<8x32xf32> -> vector<8x32xf32>
    %61 = arith.addf %59, %60 : vector<8x32xf32>
    %62 = math.tanh %61 : vector<8x32xf32>
    %63 = vector.extract_strided_slice %25 {offsets = [7, 0, 0], sizes = [1, 8, 32], strides = [1, 1, 1]} : vector<8x8x32xf32> to vector<1x8x32xf32>
    %64 = vector.shape_cast %63 : vector<1x8x32xf32> to vector<8x32xf32>
    %cst_33 = arith.constant dense<0.000000e+00> : vector<8x32xf32>
    %65 = tpu.matmul %62, %26, %cst_33 {dimension_numbers = #tpu.dot_dimension_numbers<[1], [0], [0], [1], [0, 0, 1, 1], [], []>} : vector<8x32xf32>, vector<32x32xf32>, vector<8x32xf32> -> vector<8x32xf32>
    %66 = arith.addf %64, %65 : vector<8x32xf32>
    %67 = math.tanh %66 : vector<8x32xf32>
    %68 = vector.shape_cast %32 : vector<8x32xf32> to vector<1x8x32xf32>
    %69 = vector.shape_cast %37 : vector<8x32xf32> to vector<1x8x32xf32>
    %70 = vector.shape_cast %42 : vector<8x32xf32> to vector<1x8x32xf32>
    %71 = vector.shape_cast %47 : vector<8x32xf32> to vector<1x8x32xf32>
    %72 = vector.shape_cast %52 : vector<8x32xf32> to vector<1x8x32xf32>
    %73 = vector.shape_cast %57 : vector<8x32xf32> to vector<1x8x32xf32>
    %74 = vector.shape_cast %62 : vector<8x32xf32> to vector<1x8x32xf32>
    %75 = vector.shape_cast %67 : vector<8x32xf32> to vector<1x8x32xf32>
    %76 = tpu.concatenate %68, %69, %70, %71, %72, %73, %74, %75 in 0 : vector<1x8x32xf32>, vector<1x8x32xf32>, vector<1x8x32xf32>, vector<1x8x32xf32>, vector<1x8x32xf32>, vector<1x8x32xf32>, vector<1x8x32xf32>, vector<1x8x32xf32> -> vector<8x8x32xf32>
    %c0_34 = arith.constant 0 : index
    %c0_35 = arith.constant 0 : index
    %c0_36 = arith.constant 0 : index
    %77 = vector.load %arg10[%c0_34, %c0_35, %c0_36] : memref<8x8x32xf32, #tpu.memory_space<vmem>>, vector<8x8x32xf32>
    tpu.vector_store %arg10[%c0_34, %c0_35, %c0_36], %76 {strides = array<i32>} : memref<8x8x32xf32, #tpu.memory_space<vmem>>, vector<8x8x32xf32>,
    return
  }
  func.func @transform_0(%arg0: i32) -> (i32, i32, i32) {
    %c0_i32 = arith.constant 0 : i32
    %c0_i32_0 = arith.constant 0 : i32
    %c0_i32_1 = arith.constant 0 : i32
    return %arg0, %c0_i32, %c0_i32_0 : i32, i32, i32
  }
  func.func @transform_1(%arg0: i32) -> (i32, i32, i32) {
    %c0_i32 = arith.constant 0 : i32
    %c0_i32_0 = arith.constant 0 : i32
    %c0_i32_1 = arith.constant 0 : i32
    return %arg0, %c0_i32, %c0_i32_0 : i32, i32, i32
  }
  func.func @transform_2(%arg0: i32) -> (i32, i32) {
    %c0_i32 = arith.constant 0 : i32
    %c0_i32_0 = arith.constant 0 : i32
    %c0_i32_1 = arith.constant 0 : i32
    return %c0_i32, %c0_i32_0 : i32, i32
  }
  func.func @transform_3(%arg0: i32) -> (i32, i32) {
    %c0_i32 = arith.constant 0 : i32
    %c0_i32_0 = arith.constant 0 : i32
    %c0_i32_1 = arith.constant 0 : i32
    return %c0_i32, %c0_i32_0 : i32, i32
  }
  func.func @transform_4(%arg0: i32) -> (i32, i32) {
    %c0_i32 = arith.constant 0 : i32
    %c0_i32_0 = arith.constant 0 : i32
    %c0_i32_1 = arith.constant 0 : i32
    return %c0_i32, %c0_i32_0 : i32, i32
  }
  func.func @transform_5(%arg0: i32) -> (i32, i32) {
    %c0_i32 = arith.constant 0 : i32
    %c0_i32_0 = arith.constant 0 : i32
    %c0_i32_1 = arith.constant 0 : i32
    return %c0_i32, %c0_i32_0 : i32, i32
  }
  func.func @transform_6(%arg0: i32) -> (i32, i32) {
    %c0_i32 = arith.constant 0 : i32
    %c0_i32_0 = arith.constant 0 : i32
    %c0_i32_1 = arith.constant 0 : i32
    return %c0_i32, %c0_i32_0 : i32, i32
  }
  func.func @transform_7(%arg0: i32) -> (i32, i32) {
    %c0_i32 = arith.constant 0 : i32
    %c0_i32_0 = arith.constant 0 : i32
    %c0_i32_1 = arith.constant 0 : i32
    return %c0_i32, %c0_i32_0 : i32, i32
  }
  func.func @transform_8(%arg0: i32) -> (i32, i32) {
    %c0_i32 = arith.constant 0 : i32
    %c0_i32_0 = arith.constant 0 : i32
    %c0_i32_1 = arith.constant 0 : i32
    return %c0_i32, %c0_i32_0 : i32, i32
  }
  func.func @transform_9(%arg0: i32) -> (i32, i32, i32) {
    %c0_i32 = arith.constant 0 : i32
    %c0_i32_0 = arith.constant 0 : i32
    %c0_i32_1 = arith.constant 0 : i32
    return %c0_i32, %arg0, %c0_i32_0 : i32, i32, i32
  }
}

</mosaic_0001>

<llo_original>
// kernel: tpu_custom_call.1
$region0: #{tpu_custom_call.1}
  #allocation0 [shape = 'u32[]', space=smem, size = 0x4, offset = 0x4, fixed_abs, tag = 'smem constant byte address 0x4 - core index']
  #allocation1 [shape = 'u32[144,128]{1,0:T(1,128)}', space=vmem, size = 0x12000, scoped, tag = 'internal scratch']
  %s0 = inlined_call_operand.vmem [shape: f32[1,64,64], index: 0, kind: input, shape index: {}]
  %s1 = inlined_call_operand.vmem [shape: f32[1,64,16], index: 1, kind: input, shape index: {}]
  %s2 = inlined_call_operand.hbm [shape: f32[16,32], index: 2, kind: input, shape index: {}]
  %s3 = inlined_call_operand.vmem [shape: f32[1,32], index: 3, kind: input, shape index: {}]
  %s4 = inlined_call_operand.hbm [shape: f32[32,32], index: 4, kind: input, shape index: {}]
  %s5 = inlined_call_operand.vmem [shape: f32[1,32], index: 5, kind: input, shape index: {}]
  %s6 = inlined_call_operand.vmem [shape: f32[32,32], index: 6, kind: input, shape index: {}]
  %s7 = inlined_call_operand.hbm [shape: f32[32,32], index: 7, kind: input, shape index: {}]
  %s8 = inlined_call_operand.vmem [shape: f32[1,32], index: 8, kind: input, shape index: {}]
  %s9 = inlined_call_operand.hbm [shape: f32[8,8,32], index: 9, kind: output, shape index: {}]
  %s10 = sld [smem:[#allocation0]]
  $region58: #{tpu_custom_call.1} parent=0
    _
  %s12 = ssub.s32 1, %s10
  %s13 = scalar_select 0, %s12, %s10
  $region1: #{tpu_custom_call.1} parent=0
    #allocation2 [shape = 'u8[8192]{0}', space=vmem, size = 0x2000, scoped, tag = 'input window, operand 2, single buffered']
    #allocation3 [shape = 's32[1]{0}', space=sflag, size = 0x4, scoped, tag = 'scoped memory for tpu_custom_call.1']
    #allocation4 [shape = 's32[1]{0}', space=sflag, size = 0x4, scoped, tag = 'scoped memory for tpu_custom_call.1']
    #allocation5 [shape = 'u8[16384]{0}', space=vmem, size = 0x4000, scoped, tag = 'input window, operand 4, single buffered']
    #allocation6 [shape = 's32[1]{0}', space=sflag, size = 0x4, scoped, tag = 'scoped memory for tpu_custom_call.1']
    #allocation7 [shape = 'u8[16384]{0}', space=vmem, size = 0x4000, scoped, tag = 'input window, operand 7, single buffered']
    #allocation8 [shape = 'u8[32768]{0}', space=vmem, size = 0x8000, scoped, tag = 'output window, operand 0, single buffered']
    %14 = vsyncpa [#allocation3], 0
    %15 = vsyncpa [#allocation6], 0
    %16 = vsyncpa [#allocation4], 0
    // Predicated region
    $region2: #{tpu_custom_call.1} parent=1 // pred_check
      _
    $region3: #{tpu_custom_call.1} parent=1 // pred_check_branch
      %18 = sbr.rel (0) target = $region5
    $region4: #{tpu_custom_call.1} parent=1 // pred_region
      _
    $region5: #{tpu_custom_call.1} parent=1 // pred_fallthru
      _
    // Predicated region
    $region6: #{tpu_custom_call.1} parent=1 // pred_check
      _
    $region7: #{tpu_custom_call.1} parent=1 // pred_check_branch
      %20 = sbr.rel (0) target = $region9
    $region8: #{tpu_custom_call.1} parent=1 // pred_region
      _
    $region9: #{tpu_custom_call.1} parent=1 // pred_fallthru
      _
    // Predicated region
    $region10: #{tpu_custom_call.1} parent=1 // pred_check
      _
    $region11: #{tpu_custom_call.1} parent=1 // pred_check_branch
      %22 = sbr.rel (0) target = $region13
    $region12: #{tpu_custom_call.1} parent=1 // pred_region
      %s24 = ssub.s32 256, 256
      %25 = vsyncadd [#allocation3], %s24
      %s26 = sshll.u32 [#allocation2], 4
      %s27 = int_to_ptr.vmem [resolvable:$true] %s26
      %32 = dma.hbm_to_vmem [thread:$0]  %s2, 256, %s27, [#allocation3], 128, 128, 8
    $region13: #{tpu_custom_call.1} parent=1 // pred_fallthru
      _
    // Predicated region
    $region14: #{tpu_custom_call.1} parent=1 // pred_check
      _
    $region15: #{tpu_custom_call.1} parent=1 // pred_check_branch
      %34 = sbr.rel (0) target = $region17
    $region16: #{tpu_custom_call.1} parent=1 // pred_region
      _
    $region17: #{tpu_custom_call.1} parent=1 // pred_fallthru
      _
    // Predicated region
    $region18: #{tpu_custom_call.1} parent=1 // pred_check
      _
    $region19: #{tpu_custom_call.1} parent=1 // pred_check_branch
      %36 = sbr.rel (0) target = $region21
    $region20: #{tpu_custom_call.1} parent=1 // pred_region
      %s38 = ssub.s32 512, 512
      %39 = vsyncadd [#allocation6], %s38
      %s40 = sshll.u32 [#allocation5], 4
      %s41 = int_to_ptr.vmem [resolvable:$true] %s40
      %46 = dma.hbm_to_vmem [thread:$0]  %s4, 512, %s41, [#allocation6], 128, 128, 8
    $region21: #{tpu_custom_call.1} parent=1 // pred_fallthru
      _
    // Predicated region
    $region22: #{tpu_custom_call.1} parent=1 // pred_check
      _
    $region23: #{tpu_custom_call.1} parent=1 // pred_check_branch
      %48 = sbr.rel (0) target = $region25
    $region24: #{tpu_custom_call.1} parent=1 // pred_region
      _
    $region25: #{tpu_custom_call.1} parent=1 // pred_fallthru
      _
    // Predicated region
    $region26: #{tpu_custom_call.1} parent=1 // pred_check
      _
    $region27: #{tpu_custom_call.1} parent=1 // pred_check_branch
      %50 = sbr.rel (0) target = $region29
    $region28: #{tpu_custom_call.1} parent=1 // pred_region
      _
    $region29: #{tpu_custom_call.1} parent=1 // pred_fallthru
      _
    // Predicated region
    $region30: #{tpu_custom_call.1} parent=1 // pred_check
      _
    $region31: #{tpu_custom_call.1} parent=1 // pred_check_branch
      %52 = sbr.rel (0) target = $region33
    $region32: #{tpu_custom_call.1} parent=1 // pred_region
      %s54 = ssub.s32 512, 512
      %55 = vsyncadd [#allocation6], %s54
      %s56 = sshll.u32 [#allocation7], 4
      %s57 = int_to_ptr.vmem [resolvable:$true] %s56
      %62 = dma.hbm_to_vmem [thread:$0]  %s7, 512, %s57, [#allocation6], 128, 128, 8
    $region33: #{tpu_custom_call.1} parent=1 // pred_fallthru
      _
    // Predicated region
    $region34: #{tpu_custom_call.1} parent=1 // pred_check
      _
    $region35: #{tpu_custom_call.1} parent=1 // pred_check_branch
      %64 = sbr.rel (0) target = $region37
    $region36: #{tpu_custom_call.1} parent=1 // pred_region
      _
    $region37: #{tpu_custom_call.1} parent=1 // pred_fallthru
      _
    // Predicated region
    $region38: #{tpu_custom_call.1} parent=1 // pred_check
      _
    $region39: #{tpu_custom_call.1} parent=1 // pred_check_branch
      %66 = sbr.rel (0) target = $region41
    $region40: #{tpu_custom_call.1} parent=1 // pred_region
      %67 = dma.done [#allocation3], 256
    $region41: #{tpu_custom_call.1} parent=1 // pred_fallthru
      _
    // Predicated region
    $region42: #{tpu_custom_call.1} parent=1 // pred_check
      _
    $region43: #{tpu_custom_call.1} parent=1 // pred_check_branch
      %69 = sbr.rel (0) target = $region45
    $region44: #{tpu_custom_call.1} parent=1 // pred_region
      %70 = dma.done [#allocation6], 512
    $region45: #{tpu_custom_call.1} parent=1 // pred_fallthru
      _
    // Predicated region
    $region46: #{tpu_custom_call.1} parent=1 // pred_check
      _
    $region47: #{tpu_custom_call.1} parent=1 // pred_check_branch
      %72 = sbr.rel (0) target = $region49
    $region48: #{tpu_custom_call.1} parent=1 // pred_region
      %73 = dma.done [#allocation6], 512
    $region49: #{tpu_custom_call.1} parent=1 // pred_fallthru
      _
    %v74 = vld [vmem:[%s0] sm:$0xff]
    %v75 = vld [vmem:[%s0 + $0x8] sm:$0xff]
    %v76 = vld [vmem:[%s0 + $0x10] sm:$0xff]
    %v77 = vld [vmem:[%s0 + $0x18] sm:$0xff]
    %v78 = vld [vmem:[%s0 + $0x20] sm:$0xff]
    %v79 = vld [vmem:[%s0 + $0x28] sm:$0xff]
    %v80 = vld [vmem:[%s0 + $0x30] sm:$0xff]
    %v81 = vld [vmem:[%s0 + $0x38] sm:$0xff]
    %v82 = vld [vmem:[%s1] sm:$0xff]
    %v83 = vld [vmem:[%s1 + $0x8] sm:$0xff]
    %v84 = vld [vmem:[%s1 + $0x10] sm:$0xff]
    %v85 = vld [vmem:[%s1 + $0x18] sm:$0xff]
    %v86 = vld [vmem:[%s1 + $0x20] sm:$0xff]
    %v87 = vld [vmem:[%s1 + $0x28] sm:$0xff]
    %v88 = vld [vmem:[%s1 + $0x30] sm:$0xff]
    %v89 = vld [vmem:[%s1 + $0x38] sm:$0xff]
    %v90 = vld [vmem:[#allocation2] sm:$0xff]
    %v91 = vld [vmem:[#allocation2 + $0x8] sm:$0xff]
    %v92 = vld [vmem:[%s3] sm:$0x1]
    %vm93 = vcmask 523264
    %v95 = vsel %vm93, %v74, 0
    %v98 = vsel %vm93, %v75, 0
    %v101 = vsel %vm93, %v76, 0
    %v104 = vsel %vm93, %v77, 0
    %v107 = vsel %vm93, %v78, 0
    %v110 = vsel %vm93, %v79, 0
    %v113 = vsel %vm93, %v80, 0
    %v116 = vsel %vm93, %v81, 0
    %118 = vmatprep.subr.mxu0 0.0
    %119 = vmatpush1.msra.mxu0 %v82
    %120 = vmatprep.subr.mxu0 0.0
    %121 = vmatpush1.msra.mxu0 %v83
    %122 = vmatprep.subr.mxu0 0.0
    %123 = vmatpush1.msra.mxu0 %v84
    %124 = vmatprep.subr.mxu0 0.0
    %125 = vmatpush1.msra.mxu0 %v85
    %126 = vmatprep.subr.mxu0 0.0
    %127 = vmatpush1.msra.mxu0 %v86
    %128 = vmatprep.subr.mxu0 0.0
    %129 = vmatpush1.msra.mxu0 %v87
    %130 = vmatprep.subr.mxu0 0.0
    %131 = vmatpush1.msra.mxu0 %v88
    %132 = vmatprep.subr.mxu0 0.0
    %133 = vmatpush1.msra.mxu0 %v89
    %134 = vmatprep.subr.mxu0 0.0
    %135 = vmatpush1.msra.mxu0 0.0
    %136 = vmatprep.subr.mxu0 0.0
    %137 = vmatpush1.msra.mxu0 0.0
    %138 = vmatprep.subr.mxu0 0.0
    %139 = vmatpush1.msra.mxu0 0.0
    %140 = vmatprep.subr.mxu0 0.0
    %141 = vmatpush1.msra.mxu0 0.0
    %142 = vmatprep.subr.mxu0 0.0
    %143 = vmatpush1.msra.mxu0 0.0
    %144 = vmatprep.subr.mxu0 0.0
    %145 = vmatpush1.msra.mxu0 0.0
    %146 = vmatprep.subr.mxu0 0.0
    %147 = vmatpush1.msra.mxu0 0.0
    %148 = vmatprep.subr.mxu0 0.0
    %149 = vmatpush1.msra.mxu0 0.0
    %150 = vmatprep.subr.mxu0 0.0
    %151 = vmatpush1.msra.mxu0 0.0
    %152 = vmatprep.subr.mxu0 0.0
    %153 = vmatpush1.msra.mxu0 0.0
    %154 = vmatprep.subr.mxu0 0.0
    %155 = vmatpush1.msra.mxu0 0.0
    %156 = vmatprep.subr.mxu0 0.0
    %157 = vmatpush1.msra.mxu0 0.0
    %158 = vmatprep.subr.mxu0 0.0
    %159 = vmatpush1.msra.mxu0 0.0
    %160 = vmatprep.subr.mxu0 0.0
    %161 = vmatpush1.msra.mxu0 0.0
    %162 = vmatprep.subr.mxu0 0.0
    %163 = vmatpush1.msra.mxu0 0.0
    %164 = vmatprep.subr.mxu0 0.0
    %165 = vmatpush1.msra.mxu0 0.0
    %166 = vmatprep.subr.mxu0 0.0
    %167 = vmatpush1.msra.mxu0 0.0
    %168 = vmatprep.subr.mxu0 0.0
    %169 = vmatpush1.msra.mxu0 0.0
    %170 = vmatprep.subr.mxu0 0.0
    %171 = vmatpush1.msra.mxu0 0.0
    %172 = vmatprep.subr.mxu0 0.0
    %173 = vmatpush1.msra.mxu0 0.0
    %174 = vmatprep.subr.mxu0 0.0
    %175 = vmatpush1.msra.mxu0 0.0
    %176 = vmatprep.subr.mxu0 0.0
    %177 = vmatpush1.msra.mxu0 0.0
    %178 = vmatprep.subr.mxu0 0.0
    %179 = vmatpush1.msra.mxu0 0.0
    %180 = vmatprep.subr.mxu0 0.0
    %181 = vmatpush1.msra.mxu0 0.0
    %182 = vmatprep.mubr.f32.mxu0 0.0
    %183 = vmatmul.mubr.f32.gmra.mrb[0].mxu0 %v95
    %v184 = vpop.f32.mrb[0].mxu0
    %v185 = vadd.f32 0.0, %v184
    %v186 = vpop.f32.mrb[0].mxu0
    %187 = vmatprep.mubr.f32.mxu0 0.0
    %188 = vmatmul.mubr.f32.gmra.mrb[0].mxu0 %v98
    %v189 = vpop.f32.mrb[0].mxu0
    %v190 = vadd.f32 0.0, %v189
    %v191 = vpop.f32.mrb[0].mxu0
    %192 = vmatprep.mubr.f32.mxu0 0.0
    %193 = vmatmul.mubr.f32.gmra.mrb[0].mxu0 %v101
    %v194 = vpop.f32.mrb[0].mxu0
    %v195 = vadd.f32 0.0, %v194
    %v196 = vpop.f32.mrb[0].mxu0
    %197 = vmatprep.mubr.f32.mxu0 0.0
    %198 = vmatmul.mubr.f32.gmra.mrb[0].mxu0 %v104
    %v199 = vpop.f32.mrb[0].mxu0
    %v200 = vadd.f32 0.0, %v199
    %v201 = vpop.f32.mrb[0].mxu0
    %202 = vmatprep.mubr.f32.mxu0 0.0
    %203 = vmatmul.mubr.f32.gmra.mrb[0].mxu0 %v107
    %v204 = vpop.f32.mrb[0].mxu0
    %v205 = vadd.f32 0.0, %v204
    %v206 = vpop.f32.mrb[0].mxu0
    %207 = vmatprep.mubr.f32.mxu0 0.0
    %208 = vmatmul.mubr.f32.gmra.mrb[0].mxu0 %v110
    %v209 = vpop.f32.mrb[0].mxu0
    %v210 = vadd.f32 0.0, %v209
    %v211 = vpop.f32.mrb[0].mxu0
    %212 = vmatprep.mubr.f32.mxu0 0.0
    %213 = vmatmul.mubr.f32.gmra.mrb[0].mxu0 %v113
    %v214 = vpop.f32.mrb[0].mxu0
    %v215 = vadd.f32 0.0, %v214
    %v216 = vpop.f32.mrb[0].mxu0
    %217 = vmatprep.mubr.f32.mxu0 0.0
    %218 = vmatmul.mubr.f32.gmra.mrb[0].mxu0 %v116
    %v219 = vpop.f32.mrb[0].mxu0
    %v220 = vadd.f32 0.0, %v219
    %v221 = vpop.f32.mrb[0].mxu0
    %222 = vdwg.mxu0
    %v224 = vlaneseq
    %v225 = vshrl.u32 %v224, 7
    %v226 = vsub.s32 0, %v225
    %v227 = vrot.slane %v92, %v226
    %vm229 = vcmask 130048
    %v231 = vsel %vm229, %v185, 0
    %v234 = vsel %vm229, %v190, 0
    %v237 = vsel %vm229, %v195, 0
    %v240 = vsel %vm229, %v200, 0
    %v243 = vsel %vm229, %v205, 0
    %v246 = vsel %vm229, %v210, 0
    %v249 = vsel %vm229, %v215, 0
    %v252 = vsel %vm229, %v220, 0
    %254 = vmatprep.subr.mxu0 0.0
    %255 = vmatpush1.msra.mxu0 %v90
    %256 = vmatprep.subr.mxu0 0.0
    %257 = vmatpush1.msra.mxu0 %v91
    %258 = vmatprep.subr.mxu0 0.0
    %259 = vmatpush1.msra.mxu0 0.0
    %260 = vmatprep.subr.mxu0 0.0
    %261 = vmatpush1.msra.mxu0 0.0
    %262 = vmatprep.subr.mxu0 0.0
    %263 = vmatpush1.msra.mxu0 0.0
    %264 = vmatprep.subr.mxu0 0.0
    %265 = vmatpush1.msra.mxu0 0.0
    %266 = vmatprep.subr.mxu0 0.0
    %267 = vmatpush1.msra.mxu0 0.0
    %268 = vmatprep.subr.mxu0 0.0
    %269 = vmatpush1.msra.mxu0 0.0
    %270 = vmatprep.subr.mxu0 0.0
    %271 = vmatpush1.msra.mxu0 0.0
    %272 = vmatprep.subr.mxu0 0.0
    %273 = vmatpush1.msra.mxu0 0.0
    %274 = vmatprep.subr.mxu0 0.0
    %275 = vmatpush1.msra.mxu0 0.0
    %276 = vmatprep.subr.mxu0 0.0
    %277 = vmatpush1.msra.mxu0 0.0
    %278 = vmatprep.subr.mxu0 0.0
    %279 = vmatpush1.msra.mxu0 0.0
    %280 = vmatprep.subr.mxu0 0.0
    %281 = vmatpush1.msra.mxu0 0.0
    %282 = vmatprep.subr.mxu0 0.0
    %283 = vmatpush1.msra.mxu0 0.0
    %284 = vmatprep.subr.mxu0 0.0
    %285 = vmatpush1.msra.mxu0 0.0
    %286 = vmatprep.subr.mxu0 0.0
    %287 = vmatpush1.msra.mxu0 0.0
    %288 = vmatprep.subr.mxu0 0.0
    %289 = vmatpush1.msra.mxu0 0.0
    %290 = vmatprep.subr.mxu0 0.0
    %291 = vmatpush1.msra.mxu0 0.0
    %292 = vmatprep.subr.mxu0 0.0
    %293 = vmatpush1.msra.mxu0 0.0
    %294 = vmatprep.subr.mxu0 0.0
    %295 = vmatpush1.msra.mxu0 0.0
    %296 = vmatprep.subr.mxu0 0.0
    %297 = vmatpush1.msra.mxu0 0.0
    %298 = vmatprep.subr.mxu0 0.0
    %299 = vmatpush1.msra.mxu0 0.0
    %300 = vmatprep.subr.mxu0 0.0
    %301 = vmatpush1.msra.mxu0 0.0
    %302 = vmatprep.subr.mxu0 0.0
    %303 = vmatpush1.msra.mxu0 0.0
    %304 = vmatprep.subr.mxu0 0.0
    %305 = vmatpush1.msra.mxu0 0.0
    %306 = vmatprep.subr.mxu0 0.0
    %307 = vmatpush1.msra.mxu0 0.0
    %308 = vmatprep.subr.mxu0 0.0
    %309 = vmatpush1.msra.mxu0 0.0
    %310 = vmatprep.subr.mxu0 0.0
    %311 = vmatpush1.msra.mxu0 0.0
    %312 = vmatprep.subr.mxu0 0.0
    %313 = vmatpush1.msra.mxu0 0.0
    %314 = vmatprep.subr.mxu0 0.0
    %315 = vmatpush1.msra.mxu0 0.0
    %316 = vmatprep.subr.mxu0 0.0
    %317 = vmatpush1.msra.mxu0 0.0
    %318 = vmatprep.mubr.f32.mxu0 0.0
    %319 = vmatmul.mubr.f32.gmra.mrb[0].mxu0 %v231
    %v320 = vpop.f32.mrb[0].mxu0
    %v321 = vadd.f32 %v227, %v320
    %v322 = vpop.f32.mrb[0].mxu0
    %323 = vmatprep.mubr.f32.mxu0 0.0
    %324 = vmatmul.mubr.f32.gmra.mrb[0].mxu0 %v234
    %v325 = vpop.f32.mrb[0].mxu0
    %v326 = vadd.f32 %v227, %v325
    %v327 = vpop.f32.mrb[0].mxu0
    %328 = vmatprep.mubr.f32.mxu0 0.0
    %329 = vmatmul.mubr.f32.gmra.mrb[0].mxu0 %v237
    %v330 = vpop.f32.mrb[0].mxu0
    %v331 = vadd.f32 %v227, %v330
    %v332 = vpop.f32.mrb[0].mxu0
    %333 = vmatprep.mubr.f32.mxu0 0.0
    %334 = vmatmul.mubr.f32.gmra.mrb[0].mxu0 %v240
    %v335 = vpop.f32.mrb[0].mxu0
    %v336 = vadd.f32 %v227, %v335
    %v337 = vpop.f32.mrb[0].mxu0
    %338 = vmatprep.mubr.f32.mxu0 0.0
    %339 = vmatmul.mubr.f32.gmra.mrb[0].mxu0 %v243
    %v340 = vpop.f32.mrb[0].mxu0
    %v341 = vadd.f32 %v227, %v340
    %v342 = vpop.f32.mrb[0].mxu0
    %343 = vmatprep.mubr.f32.mxu0 0.0
    %344 = vmatmul.mubr.f32.gmra.mrb[0].mxu0 %v246
    %v345 = vpop.f32.mrb[0].mxu0
    %v346 = vadd.f32 %v227, %v345
    %v347 = vpop.f32.mrb[0].mxu0
    %348 = vmatprep.mubr.f32.mxu0 0.0
    %349 = vmatmul.mubr.f32.gmra.mrb[0].mxu0 %v249
    %v350 = vpop.f32.mrb[0].mxu0
    %v351 = vadd.f32 %v227, %v350
    %v352 = vpop.f32.mrb[0].mxu0
    %353 = vmatprep.mubr.f32.mxu0 0.0
    %354 = vmatmul.mubr.f32.gmra.mrb[0].mxu0 %v252
    %v355 = vpop.f32.mrb[0].mxu0
    %v356 = vadd.f32 %v227, %v355
    %v357 = vpop.f32.mrb[0].mxu0
    %358 = vdwg.mxu0
    %v359 = vmax.f32 %v321, 0.0
    %v360 = vmax.f32 %v326, 0.0
    %v361 = vmax.f32 %v331, 0.0
    %v362 = vmax.f32 %v336, 0.0
    %v363 = vmax.f32 %v341, 0.0
    %v364 = vmax.f32 %v346, 0.0
    %v365 = vmax.f32 %v351, 0.0
    %v366 = vmax.f32 %v356, 0.0
    %v367 = vld [vmem:[#allocation5] sm:$0xff]
    %v368 = vld [vmem:[#allocation5 + $0x8] sm:$0xff]
    %v369 = vld [vmem:[#allocation5 + $0x10] sm:$0xff]
    %v370 = vld [vmem:[#allocation5 + $0x18] sm:$0xff]
    %v371 = vld [vmem:[%s5] sm:$0x1]
    %372 = vmatprep.subr.mxu0 0.0
    %373 = vmatpush1.msra.mxu0 %v359
    %374 = vmatprep.subr.mxu0 0.0
    %375 = vmatpush1.msra.mxu0 %v360
    %376 = vmatprep.subr.mxu0 0.0
    %377 = vmatpush1.msra.mxu0 %v361
    %378 = vmatprep.subr.mxu0 0.0
    %379 = vmatpush1.msra.mxu0 %v362
    %380 = vmatprep.subr.mxu0 0.0
    %381 = vmatpush1.msra.mxu0 %v363
    %382 = vmatprep.subr.mxu0 0.0
    %383 = vmatpush1.msra.mxu0 %v364
    %384 = vmatprep.subr.mxu0 0.0
    %385 = vmatpush1.msra.mxu0 %v365
    %386 = vmatprep.subr.mxu0 0.0
    %387 = vmatpush1.msra.mxu0 %v366
    %388 = vmatprep.subr.mxu0 0.0
    %389 = vmatpush1.msra.mxu0 0.0
    %390 = vmatprep.subr.mxu0 0.0
    %391 = vmatpush1.msra.mxu0 0.0
    %392 = vmatprep.subr.mxu0 0.0
    %393 = vmatpush1.msra.mxu0 0.0
    %394 = vmatprep.subr.mxu0 0.0
    %395 = vmatpush1.msra.mxu0 0.0
    %396 = vmatprep.subr.mxu0 0.0
    %397 = vmatpush1.msra.mxu0 0.0
    %398 = vmatprep.subr.mxu0 0.0
    %399 = vmatpush1.msra.mxu0 0.0
    %400 = vmatprep.subr.mxu0 0.0
    %401 = vmatpush1.msra.mxu0 0.0
    %402 = vmatprep.subr.mxu0 0.0
    %403 = vmatpush1.msra.mxu0 0.0
    %404 = vmatprep.subr.mxu0 0.0
    %405 = vmatpush1.msra.mxu0 0.0
    %406 = vmatprep.subr.mxu0 0.0
    %407 = vmatpush1.msra.mxu0 0.0
    %408 = vmatprep.subr.mxu0 0.0
    %409 = vmatpush1.msra.mxu0 0.0
    %410 = vmatprep.subr.mxu0 0.0
    %411 = vmatpush1.msra.mxu0 0.0
    %412 = vmatprep.subr.mxu0 0.0
    %413 = vmatpush1.msra.mxu0 0.0
    %414 = vmatprep.subr.mxu0 0.0
    %415 = vmatpush1.msra.mxu0 0.0
    %416 = vmatprep.subr.mxu0 0.0
    %417 = vmatpush1.msra.mxu0 0.0
    %418 = vmatprep.subr.mxu0 0.0
    %419 = vmatpush1.msra.mxu0 0.0
    %420 = vmatprep.subr.mxu0 0.0
    %421 = vmatpush1.msra.mxu0 0.0
    %422 = vmatprep.subr.mxu0 0.0
    %423 = vmatpush1.msra.mxu0 0.0
    %424 = vmatprep.subr.mxu0 0.0
    %425 = vmatpush1.msra.mxu0 0.0
    %426 = vmatprep.subr.mxu0 0.0
    %427 = vmatpush1.msra.mxu0 0.0
    %428 = vmatprep.subr.mxu0 0.0
    %429 = vmatpush1.msra.mxu0 0.0
    %430 = vmatprep.subr.mxu0 0.0
    %431 = vmatpush1.msra.mxu0 0.0
    %432 = vmatprep.subr.mxu0 0.0
    %433 = vmatpush1.msra.mxu0 0.0
    %434 = vmatprep.subr.mxu0 0.0
    %435 = vmatpush1.msra.mxu0 0.0
    %436 = vmatprep.mubr.f32.mxu0 0.0
    %437 = vmatmul.mubr.f32.gmra.mrb[0].mxu0 %v95
    %v438 = vpop.f32.mrb[0].mxu0
    %v439 = vadd.f32 0.0, %v438
    %v440 = vpop.f32.mrb[0].mxu0
    %441 = vmatprep.mubr.f32.mxu0 0.0
    %442 = vmatmul.mubr.f32.gmra.mrb[0].mxu0 %v98
    %v443 = vpop.f32.mrb[0].mxu0
    %v444 = vadd.f32 0.0, %v443
    %v445 = vpop.f32.mrb[0].mxu0
    %446 = vmatprep.mubr.f32.mxu0 0.0
    %447 = vmatmul.mubr.f32.gmra.mrb[0].mxu0 %v101
    %v448 = vpop.f32.mrb[0].mxu0
    %v449 = vadd.f32 0.0, %v448
    %v450 = vpop.f32.mrb[0].mxu0
    %451 = vmatprep.mubr.f32.mxu0 0.0
    %452 = vmatmul.mubr.f32.gmra.mrb[0].mxu0 %v104
    %v453 = vpop.f32.mrb[0].mxu0
    %v454 = vadd.f32 0.0, %v453
    %v455 = vpop.f32.mrb[0].mxu0
    %456 = vmatprep.mubr.f32.mxu0 0.0
    %457 = vmatmul.mubr.f32.gmra.mrb[0].mxu0 %v107
    %v458 = vpop.f32.mrb[0].mxu0
    %v459 = vadd.f32 0.0, %v458
    %v460 = vpop.f32.mrb[0].mxu0
    %461 = vmatprep.mubr.f32.mxu0 0.0
    %462 = vmatmul.mubr.f32.gmra.mrb[0].mxu0 %v110
    %v463 = vpop.f32.mrb[0].mxu0
    %v464 = vadd.f32 0.0, %v463
    %v465 = vpop.f32.mrb[0].mxu0
    %466 = vmatprep.mubr.f32.mxu0 0.0
    %467 = vmatmul.mubr.f32.gmra.mrb[0].mxu0 %v113
    %v468 = vpop.f32.mrb[0].mxu0
    %v469 = vadd.f32 0.0, %v468
    %v470 = vpop.f32.mrb[0].mxu0
    %471 = vmatprep.mubr.f32.mxu0 0.0
    %472 = vmatmul.mubr.f32.gmra.mrb[0].mxu0 %v116
    %v473 = vpop.f32.mrb[0].mxu0
    %v474 = vadd.f32 0.0, %v473
    %v475 = vpop.f32.mrb[0].mxu0
    %476 = vdwg.mxu0
    %v478 = vlaneseq
    %v479 = vshrl.u32 %v478, 7
    %v480 = vsub.s32 0, %v479
    %v481 = vrot.slane %v371, %v480
    %vm483 = vcmask 261120
    %v485 = vsel %vm483, %v439, 0
    %v488 = vsel %vm483, %v444, 0
    %v491 = vsel %vm483, %v449, 0
    %v494 = vsel %vm483, %v454, 0
    %v497 = vsel %vm483, %v459, 0
    %v500 = vsel %vm483, %v464, 0
    %v503 = vsel %vm483, %v469, 0
    %v506 = vsel %vm483, %v474, 0
    %508 = vmatprep.subr.mxu0 0.0
    %509 = vmatpush1.msra.mxu0 %v367
    %510 = vmatprep.subr.mxu0 0.0
    %511 = vmatpush1.msra.mxu0 %v368
    %512 = vmatprep.subr.mxu0 0.0
    %513 = vmatpush1.msra.mxu0 %v369
    %514 = vmatprep.subr.mxu0 0.0
    %515 = vmatpush1.msra.mxu0 %v370
    %516 = vmatprep.subr.mxu0 0.0
    %517 = vmatpush1.msra.mxu0 0.0
    %518 = vmatprep.subr.mxu0 0.0
    %519 = vmatpush1.msra.mxu0 0.0
    %520 = vmatprep.subr.mxu0 0.0
    %521 = vmatpush1.msra.mxu0 0.0
    %522 = vmatprep.subr.mxu0 0.0
    %523 = vmatpush1.msra.mxu0 0.0
    %524 = vmatprep.subr.mxu0 0.0
    %525 = vmatpush1.msra.mxu0 0.0
    %526 = vmatprep.subr.mxu0 0.0
    %527 = vmatpush1.msra.mxu0 0.0
    %528 = vmatprep.subr.mxu0 0.0
    %529 = vmatpush1.msra.mxu0 0.0
    %530 = vmatprep.subr.mxu0 0.0
    %531 = vmatpush1.msra.mxu0 0.0
    %532 = vmatprep.subr.mxu0 0.0
    %533 = vmatpush1.msra.mxu0 0.0
    %534 = vmatprep.subr.mxu0 0.0
    %535 = vmatpush1.msra.mxu0 0.0
    %536 = vmatprep.subr.mxu0 0.0
    %537 = vmatpush1.msra.mxu0 0.0
    %538 = vmatprep.subr.mxu0 0.0
    %539 = vmatpush1.msra.mxu0 0.0
    %540 = vmatprep.subr.mxu0 0.0
    %541 = vmatpush1.msra.mxu0 0.0
    %542 = vmatprep.subr.mxu0 0.0
    %543 = vmatpush1.msra.mxu0 0.0
    %544 = vmatprep.subr.mxu0 0.0
    %545 = vmatpush1.msra.mxu0 0.0
    %546 = vmatprep.subr.mxu0 0.0
    %547 = vmatpush1.msra.mxu0 0.0
    %548 = vmatprep.subr.mxu0 0.0
    %549 = vmatpush1.msra.mxu0 0.0
    %550 = vmatprep.subr.mxu0 0.0
    %551 = vmatpush1.msra.mxu0 0.0
    %552 = vmatprep.subr.mxu0 0.0
    %553 = vmatpush1.msra.mxu0 0.0
    %554 = vmatprep.subr.mxu0 0.0
    %555 = vmatpush1.msra.mxu0 0.0
    %556 = vmatprep.subr.mxu0 0.0
    %557 = vmatpush1.msra.mxu0 0.0
    %558 = vmatprep.subr.mxu0 0.0
    %559 = vmatpush1.msra.mxu0 0.0
    %560 = vmatprep.subr.mxu0 0.0
    %561 = vmatpush1.msra.mxu0 0.0
    %562 = vmatprep.subr.mxu0 0.0
    %563 = vmatpush1.msra.mxu0 0.0
    %564 = vmatprep.subr.mxu0 0.0
    %565 = vmatpush1.msra.mxu0 0.0
    %566 = vmatprep.subr.mxu0 0.0
    %567 = vmatpush1.msra.mxu0 0.0
    %568 = vmatprep.subr.mxu0 0.0
    %569 = vmatpush1.msra.mxu0 0.0
    %570 = vmatprep.subr.mxu0 0.0
    %571 = vmatpush1.msra.mxu0 0.0
    %572 = vmatprep.mubr.f32.mxu0 0.0
    %573 = vmatmul.mubr.f32.gmra.mrb[0].mxu0 %v485
    %v574 = vpop.f32.mrb[0].mxu0
    %v575 = vadd.f32 %v481, %v574
    %v576 = vpop.f32.mrb[0].mxu0
    %577 = vmatprep.mubr.f32.mxu0 0.0
    %578 = vmatmul.mubr.f32.gmra.mrb[0].mxu0 %v488
    %v579 = vpop.f32.mrb[0].mxu0
    %v580 = vadd.f32 %v481, %v579
    %v581 = vpop.f32.mrb[0].mxu0
    %582 = vmatprep.mubr.f32.mxu0 0.0
    %583 = vmatmul.mubr.f32.gmra.mrb[0].mxu0 %v491
    %v584 = vpop.f32.mrb[0].mxu0
    %v585 = vadd.f32 %v481, %v584
    %v586 = vpop.f32.mrb[0].mxu0
    %587 = vmatprep.mubr.f32.mxu0 0.0
    %588 = vmatmul.mubr.f32.gmra.mrb[0].mxu0 %v494
    %v589 = vpop.f32.mrb[0].mxu0
    %v590 = vadd.f32 %v481, %v589
    %v591 = vpop.f32.mrb[0].mxu0
    %592 = vmatprep.mubr.f32.mxu0 0.0
    %593 = vmatmul.mubr.f32.gmra.mrb[0].mxu0 %v497
    %v594 = vpop.f32.mrb[0].mxu0
    %v595 = vadd.f32 %v481, %v594
    %v596 = vpop.f32.mrb[0].mxu0
    %597 = vmatprep.mubr.f32.mxu0 0.0
    %598 = vmatmul.mubr.f32.gmra.mrb[0].mxu0 %v500
    %v599 = vpop.f32.mrb[0].mxu0
    %v600 = vadd.f32 %v481, %v599
    %v601 = vpop.f32.mrb[0].mxu0
    %602 = vmatprep.mubr.f32.mxu0 0.0
    %603 = vmatmul.mubr.f32.gmra.mrb[0].mxu0 %v503
    %v604 = vpop.f32.mrb[0].mxu0
    %v605 = vadd.f32 %v481, %v604
    %v606 = vpop.f32.mrb[0].mxu0
    %607 = vmatprep.mubr.f32.mxu0 0.0
    %608 = vmatmul.mubr.f32.gmra.mrb[0].mxu0 %v506
    %v609 = vpop.f32.mrb[0].mxu0
    %v610 = vadd.f32 %v481, %v609
    %v611 = vpop.f32.mrb[0].mxu0
    %612 = vdwg.mxu0
    %v613 = vmax.f32 %v575, 0.0
    %v614 = vmax.f32 %v580, 0.0
    %v615 = vmax.f32 %v585, 0.0
    %v616 = vmax.f32 %v590, 0.0
    %v617 = vmax.f32 %v595, 0.0
    %v618 = vmax.f32 %v600, 0.0
    %v619 = vmax.f32 %v605, 0.0
    %v620 = vmax.f32 %v610, 0.0
    %v621 = vld [vmem:[%s6] sm:$0xff]
    %v622 = vld [vmem:[%s6 + $0x8] sm:$0xff]
    %v623 = vld [vmem:[%s6 + $0x10] sm:$0xff]
    %v624 = vld [vmem:[%s6 + $0x18] sm:$0xff]
    %v625 = vld [vmem:[%s8] sm:$0x1]
    %v627 = vlaneseq
    %v628 = vshrl.u32 %v627, 7
    %v629 = vsub.s32 0, %v628
    %v630 = vrot.slane %v625, %v629
    %v633 = vsel %vm483, %v613, 0
    %v636 = vsel %vm483, %v614, 0
    %v639 = vsel %vm483, %v615, 0
    %v642 = vsel %vm483, %v616, 0
    %v645 = vsel %vm483, %v617, 0
    %v648 = vsel %vm483, %v618, 0
    %v651 = vsel %vm483, %v619, 0
    %v654 = vsel %vm483, %v620, 0
    %656 = vmatprep.subr.mxu0 0.0
    %657 = vmatpush1.msra.mxu0 %v621
    %658 = vmatprep.subr.mxu0 0.0
    %659 = vmatpush1.msra.mxu0 %v622
    %660 = vmatprep.subr.mxu0 0.0
    %661 = vmatpush1.msra.mxu0 %v623
    %662 = vmatprep.subr.mxu0 0.0
    %663 = vmatpush1.msra.mxu0 %v624
    %664 = vmatprep.subr.mxu0 0.0
    %665 = vmatpush1.msra.mxu0 0.0
    %666 = vmatprep.subr.mxu0 0.0
    %667 = vmatpush1.msra.mxu0 0.0
    %668 = vmatprep.subr.mxu0 0.0
    %669 = vmatpush1.msra.mxu0 0.0
    %670 = vmatprep.subr.mxu0 0.0
    %671 = vmatpush1.msra.mxu0 0.0
    %672 = vmatprep.subr.mxu0 0.0
    %673 = vmatpush1.msra.mxu0 0.0
    %674 = vmatprep.subr.mxu0 0.0
    %675 = vmatpush1.msra.mxu0 0.0
    %676 = vmatprep.subr.mxu0 0.0
    %677 = vmatpush1.msra.mxu0 0.0
    %678 = vmatprep.subr.mxu0 0.0
    %679 = vmatpush1.msra.mxu0 0.0
    %680 = vmatprep.subr.mxu0 0.0
    %681 = vmatpush1.msra.mxu0 0.0
    %682 = vmatprep.subr.mxu0 0.0
    %683 = vmatpush1.msra.mxu0 0.0
    %684 = vmatprep.subr.mxu0 0.0
    %685 = vmatpush1.msra.mxu0 0.0
    %686 = vmatprep.subr.mxu0 0.0
    %687 = vmatpush1.msra.mxu0 0.0
    %688 = vmatprep.subr.mxu0 0.0
    %689 = vmatpush1.msra.mxu0 0.0
    %690 = vmatprep.subr.mxu0 0.0
    %691 = vmatpush1.msra.mxu0 0.0
    %692 = vmatprep.subr.mxu0 0.0
    %693 = vmatpush1.msra.mxu0 0.0
    %694 = vmatprep.subr.mxu0 0.0
    %695 = vmatpush1.msra.mxu0 0.0
    %696 = vmatprep.subr.mxu0 0.0
    %697 = vmatpush1.msra.mxu0 0.0
    %698 = vmatprep.subr.mxu0 0.0
    %699 = vmatpush1.msra.mxu0 0.0
    %700 = vmatprep.subr.mxu0 0.0
    %701 = vmatpush1.msra.mxu0 0.0
    %702 = vmatprep.subr.mxu0 0.0
    %703 = vmatpush1.msra.mxu0 0.0
    %704 = vmatprep.subr.mxu0 0.0
    %705 = vmatpush1.msra.mxu0 0.0
    %706 = vmatprep.subr.mxu0 0.0
    %707 = vmatpush1.msra.mxu0 0.0
    %708 = vmatprep.subr.mxu0 0.0
    %709 = vmatpush1.msra.mxu0 0.0
    %710 = vmatprep.subr.mxu0 0.0
    %711 = vmatpush1.msra.mxu0 0.0
    %712 = vmatprep.subr.mxu0 0.0
    %713 = vmatpush1.msra.mxu0 0.0
    %714 = vmatprep.subr.mxu0 0.0
    %715 = vmatpush1.msra.mxu0 0.0
    %716 = vmatprep.subr.mxu0 0.0
    %717 = vmatpush1.msra.mxu0 0.0
    %718 = vmatprep.subr.mxu0 0.0
    %719 = vmatpush1.msra.mxu0 0.0
    %720 = vmatprep.mubr.f32.mxu0 0.0
    %721 = vmatmul.mubr.f32.gmra.mrb[0].mxu0 %v633
    %v722 = vpop.f32.mrb[0].mxu0
    %v723 = vadd.f32 %v630, %v722
    %v724 = vpop.f32.mrb[0].mxu0
    %725 = vmatprep.mubr.f32.mxu0 0.0
    %726 = vmatmul.mubr.f32.gmra.mrb[0].mxu0 %v636
    %v727 = vpop.f32.mrb[0].mxu0
    %v728 = vadd.f32 %v630, %v727
    %v729 = vpop.f32.mrb[0].mxu0
    %730 = vmatprep.mubr.f32.mxu0 0.0
    %731 = vmatmul.mubr.f32.gmra.mrb[0].mxu0 %v639
    %v732 = vpop.f32.mrb[0].mxu0
    %v733 = vadd.f32 %v630, %v732
    %v734 = vpop.f32.mrb[0].mxu0
    %735 = vmatprep.mubr.f32.mxu0 0.0
    %736 = vmatmul.mubr.f32.gmra.mrb[0].mxu0 %v642
    %v737 = vpop.f32.mrb[0].mxu0
    %v738 = vadd.f32 %v630, %v737
    %v739 = vpop.f32.mrb[0].mxu0
    %740 = vmatprep.mubr.f32.mxu0 0.0
    %741 = vmatmul.mubr.f32.gmra.mrb[0].mxu0 %v645
    %v742 = vpop.f32.mrb[0].mxu0
    %v743 = vadd.f32 %v630, %v742
    %v744 = vpop.f32.mrb[0].mxu0
    %745 = vmatprep.mubr.f32.mxu0 0.0
    %746 = vmatmul.mubr.f32.gmra.mrb[0].mxu0 %v648
    %v747 = vpop.f32.mrb[0].mxu0
    %v748 = vadd.f32 %v630, %v747
    %v749 = vpop.f32.mrb[0].mxu0
    %750 = vmatprep.mubr.f32.mxu0 0.0
    %751 = vmatmul.mubr.f32.gmra.mrb[0].mxu0 %v651
    %v752 = vpop.f32.mrb[0].mxu0
    %v753 = vadd.f32 %v630, %v752
    %v754 = vpop.f32.mrb[0].mxu0
    %755 = vmatprep.mubr.f32.mxu0 0.0
    %756 = vmatmul.mubr.f32.gmra.mrb[0].mxu0 %v654
    %v757 = vpop.f32.mrb[0].mxu0
    %v758 = vadd.f32 %v630, %v757
    %v759 = vpop.f32.mrb[0].mxu0
    %760 = vdwg.mxu0
    %v761 = vld [vmem:[#allocation7] sm:$0xff]
    %v762 = vld [vmem:[#allocation7 + $0x8] sm:$0xff]
    %v763 = vld [vmem:[#allocation7 + $0x10] sm:$0xff]
    %v764 = vld [vmem:[#allocation7 + $0x18] sm:$0xff]
    %v766 = vsel %vm483, 0.0, 0
    %768 = vmatprep.subr.mxu0 0.0
    %769 = vmatpush1.msra.mxu0 %v761
    %770 = vmatprep.subr.mxu0 0.0
    %771 = vmatpush1.msra.mxu0 %v762
    %772 = vmatprep.subr.mxu0 0.0
    %773 = vmatpush1.msra.mxu0 %v763
    %774 = vmatprep.subr.mxu0 0.0
    %775 = vmatpush1.msra.mxu0 %v764
    %776 = vmatprep.subr.mxu0 0.0
    %777 = vmatpush1.msra.mxu0 0.0
    %778 = vmatprep.subr.mxu0 0.0
    %779 = vmatpush1.msra.mxu0 0.0
    %780 = vmatprep.subr.mxu0 0.0
    %781 = vmatpush1.msra.mxu0 0.0
    %782 = vmatprep.subr.mxu0 0.0
    %783 = vmatpush1.msra.mxu0 0.0
    %784 = vmatprep.subr.mxu0 0.0
    %785 = vmatpush1.msra.mxu0 0.0
    %786 = vmatprep.subr.mxu0 0.0
    %787 = vmatpush1.msra.mxu0 0.0
    %788 = vmatprep.subr.mxu0 0.0
    %789 = vmatpush1.msra.mxu0 0.0
    %790 = vmatprep.subr.mxu0 0.0
    %791 = vmatpush1.msra.mxu0 0.0
    %792 = vmatprep.subr.mxu0 0.0
    %793 = vmatpush1.msra.mxu0 0.0
    %794 = vmatprep.subr.mxu0 0.0
    %795 = vmatpush1.msra.mxu0 0.0
    %796 = vmatprep.subr.mxu0 0.0
    %797 = vmatpush1.msra.mxu0 0.0
    %798 = vmatprep.subr.mxu0 0.0
    %799 = vmatpush1.msra.mxu0 0.0
    %800 = vmatprep.subr.mxu0 0.0
    %801 = vmatpush1.msra.mxu0 0.0
    %802 = vmatprep.subr.mxu0 0.0
    %803 = vmatpush1.msra.mxu0 0.0
    %804 = vmatprep.subr.mxu0 0.0
    %805 = vmatpush1.msra.mxu0 0.0
    %806 = vmatprep.subr.mxu0 0.0
    %807 = vmatpush1.msra.mxu0 0.0
    %808 = vmatprep.subr.mxu0 0.0
    %809 = vmatpush1.msra.mxu0 0.0
    %810 = vmatprep.subr.mxu0 0.0
    %811 = vmatpush1.msra.mxu0 0.0
    %812 = vmatprep.subr.mxu0 0.0
    %813 = vmatpush1.msra.mxu0 0.0
    %814 = vmatprep.subr.mxu0 0.0
    %815 = vmatpush1.msra.mxu0 0.0
    %816 = vmatprep.subr.mxu0 0.0
    %817 = vmatpush1.msra.mxu0 0.0
    %818 = vmatprep.subr.mxu0 0.0
    %819 = vmatpush1.msra.mxu0 0.0
    %820 = vmatprep.subr.mxu0 0.0
    %821 = vmatpush1.msra.mxu0 0.0
    %822 = vmatprep.subr.mxu0 0.0
    %823 = vmatpush1.msra.mxu0 0.0
    %824 = vmatprep.subr.mxu0 0.0
    %825 = vmatpush1.msra.mxu0 0.0
    %826 = vmatprep.subr.mxu0 0.0
    %827 = vmatpush1.msra.mxu0 0.0
    %828 = vmatprep.subr.mxu0 0.0
    %829 = vmatpush1.msra.mxu0 0.0
    %830 = vmatprep.subr.mxu0 0.0
    %831 = vmatpush1.msra.mxu0 0.0
    %832 = vmatprep.mubr.f32.mxu0 0.0
    %833 = vmatmul.mubr.f32.gmra.mrb[0].mxu0 %v766
    %v834 = vpop.f32.mrb[0].mxu0
    %v835 = vadd.f32 0.0, %v834
    %v836 = vpop.f32.mrb[0].mxu0
    %837 = vdwg.mxu0
    %v838 = vadd.f32 %v723, %v835
    %v839 = vtanh.pop %v838
    %v841 = vsel %vm483, %v839, 0
    %843 = vmatprep.subr.mxu0 0.0
    %844 = vmatpush1.msra.mxu0 %v761
    %845 = vmatprep.subr.mxu0 0.0
    %846 = vmatpush1.msra.mxu0 %v762
    %847 = vmatprep.subr.mxu0 0.0
    %848 = vmatpush1.msra.mxu0 %v763
    %849 = vmatprep.subr.mxu0 0.0
    %850 = vmatpush1.msra.mxu0 %v764
    %851 = vmatprep.subr.mxu0 0.0
    %852 = vmatpush1.msra.mxu0 0.0
    %853 = vmatprep.subr.mxu0 0.0
    %854 = vmatpush1.msra.mxu0 0.0
    %855 = vmatprep.subr.mxu0 0.0
    %856 = vmatpush1.msra.mxu0 0.0
    %857 = vmatprep.subr.mxu0 0.0
    %858 = vmatpush1.msra.mxu0 0.0
    %859 = vmatprep.subr.mxu0 0.0
    %860 = vmatpush1.msra.mxu0 0.0
    %861 = vmatprep.subr.mxu0 0.0
    %862 = vmatpush1.msra.mxu0 0.0
    %863 = vmatprep.subr.mxu0 0.0
    %864 = vmatpush1.msra.mxu0 0.0
    %865 = vmatprep.subr.mxu0 0.0
    %866 = vmatpush1.msra.mxu0 0.0
    %867 = vmatprep.subr.mxu0 0.0
    %868 = vmatpush1.msra.mxu0 0.0
    %869 = vmatprep.subr.mxu0 0.0
    %870 = vmatpush1.msra.mxu0 0.0
    %871 = vmatprep.subr.mxu0 0.0
    %872 = vmatpush1.msra.mxu0 0.0
    %873 = vmatprep.subr.mxu0 0.0
    %874 = vmatpush1.msra.mxu0 0.0
    %875 = vmatprep.subr.mxu0 0.0
    %876 = vmatpush1.msra.mxu0 0.0
    %877 = vmatprep.subr.mxu0 0.0
    %878 = vmatpush1.msra.mxu0 0.0
    %879 = vmatprep.subr.mxu0 0.0
    %880 = vmatpush1.msra.mxu0 0.0
    %881 = vmatprep.subr.mxu0 0.0
    %882 = vmatpush1.msra.mxu0 0.0
    %883 = vmatprep.subr.mxu0 0.0
    %884 = vmatpush1.msra.mxu0 0.0
    %885 = vmatprep.subr.mxu0 0.0
    %886 = vmatpush1.msra.mxu0 0.0
    %887 = vmatprep.subr.mxu0 0.0
    %888 = vmatpush1.msra.mxu0 0.0
    %889 = vmatprep.subr.mxu0 0.0
    %890 = vmatpush1.msra.mxu0 0.0
    %891 = vmatprep.subr.mxu0 0.0
    %892 = vmatpush1.msra.mxu0 0.0
    %893 = vmatprep.subr.mxu0 0.0
    %894 = vmatpush1.msra.mxu0 0.0
    %895 = vmatprep.subr.mxu0 0.0
    %896 = vmatpush1.msra.mxu0 0.0
    %897 = vmatprep.subr.mxu0 0.0
    %898 = vmatpush1.msra.mxu0 0.0
    %899 = vmatprep.subr.mxu0 0.0
    %900 = vmatpush1.msra.mxu0 0.0
    %901 = vmatprep.subr.mxu0 0.0
    %902 = vmatpush1.msra.mxu0 0.0
    %903 = vmatprep.subr.mxu0 0.0
    %904 = vmatpush1.msra.mxu0 0.0
    %905 = vmatprep.subr.mxu0 0.0
    %906 = vmatpush1.msra.mxu0 0.0
    %907 = vmatprep.mubr.f32.mxu0 0.0
    %908 = vmatmul.mubr.f32.gmra.mrb[0].mxu0 %v841
    %v909 = vpop.f32.mrb[0].mxu0
    %v910 = vadd.f32 0.0, %v909
    %v911 = vpop.f32.mrb[0].mxu0
    %912 = vdwg.mxu0
    %v913 = vadd.f32 %v728, %v910
    %v914 = vtanh.pop %v913
    %v916 = vsel %vm483, %v914, 0
    %918 = vmatprep.subr.mxu0 0.0
    %919 = vmatpush1.msra.mxu0 %v761
    %920 = vmatprep.subr.mxu0 0.0
    %921 = vmatpush1.msra.mxu0 %v762
    %922 = vmatprep.subr.mxu0 0.0
    %923 = vmatpush1.msra.mxu0 %v763
    %924 = vmatprep.subr.mxu0 0.0
    %925 = vmatpush1.msra.mxu0 %v764
    %926 = vmatprep.subr.mxu0 0.0
    %927 = vmatpush1.msra.mxu0 0.0
    %928 = vmatprep.subr.mxu0 0.0
    %929 = vmatpush1.msra.mxu0 0.0
    %930 = vmatprep.subr.mxu0 0.0
    %931 = vmatpush1.msra.mxu0 0.0
    %932 = vmatprep.subr.mxu0 0.0
    %933 = vmatpush1.msra.mxu0 0.0
    %934 = vmatprep.subr.mxu0 0.0
    %935 = vmatpush1.msra.mxu0 0.0
    %936 = vmatprep.subr.mxu0 0.0
    %937 = vmatpush1.msra.mxu0 0.0
    %938 = vmatprep.subr.mxu0 0.0
    %939 = vmatpush1.msra.mxu0 0.0
    %940 = vmatprep.subr.mxu0 0.0
    %941 = vmatpush1.msra.mxu0 0.0
    %942 = vmatprep.subr.mxu0 0.0
    %943 = vmatpush1.msra.mxu0 0.0
    %944 = vmatprep.subr.mxu0 0.0
    %945 = vmatpush1.msra.mxu0 0.0
    %946 = vmatprep.subr.mxu0 0.0
    %947 = vmatpush1.msra.mxu0 0.0
    %948 = vmatprep.subr.mxu0 0.0
    %949 = vmatpush1.msra.mxu0 0.0
    %950 = vmatprep.subr.mxu0 0.0
    %951 = vmatpush1.msra.mxu0 0.0
    %952 = vmatprep.subr.mxu0 0.0
    %953 = vmatpush1.msra.mxu0 0.0
    %954 = vmatprep.subr.mxu0 0.0
    %955 = vmatpush1.msra.mxu0 0.0
    %956 = vmatprep.subr.mxu0 0.0
    %957 = vmatpush1.msra.mxu0 0.0
    %958 = vmatprep.subr.mxu0 0.0
    %959 = vmatpush1.msra.mxu0 0.0
    %960 = vmatprep.subr.mxu0 0.0
    %961 = vmatpush1.msra.mxu0 0.0
    %962 = vmatprep.subr.mxu0 0.0
    %963 = vmatpush1.msra.mxu0 0.0
    %964 = vmatprep.subr.mxu0 0.0
    %965 = vmatpush1.msra.mxu0 0.0
    %966 = vmatprep.subr.mxu0 0.0
    %967 = vmatpush1.msra.mxu0 0.0
    %968 = vmatprep.subr.mxu0 0.0
    %969 = vmatpush1.msra.mxu0 0.0
    %970 = vmatprep.subr.mxu0 0.0
    %971 = vmatpush1.msra.mxu0 0.0
    %972 = vmatprep.subr.mxu0 0.0
    %973 = vmatpush1.msra.mxu0 0.0
    %974 = vmatprep.subr.mxu0 0.0
    %975 = vmatpush1.msra.mxu0 0.0
    %976 = vmatprep.subr.mxu0 0.0
    %977 = vmatpush1.msra.mxu0 0.0
    %978 = vmatprep.subr.mxu0 0.0
    %979 = vmatpush1.msra.mxu0 0.0
    %980 = vmatprep.subr.mxu0 0.0
    %981 = vmatpush1.msra.mxu0 0.0
    %982 = vmatprep.mubr.f32.mxu0 0.0
    %983 = vmatmul.mubr.f32.gmra.mrb[0].mxu0 %v916
    %v984 = vpop.f32.mrb[0].mxu0
    %v985 = vadd.f32 0.0, %v984
    %v986 = vpop.f32.mrb[0].mxu0
    %987 = vdwg.mxu0
    %v988 = vadd.f32 %v733, %v985
    %v989 = vtanh.pop %v988
    %v991 = vsel %vm483, %v989, 0
    %993 = vmatprep.subr.mxu0 0.0
    %994 = vmatpush1.msra.mxu0 %v761
    %995 = vmatprep.subr.mxu0 0.0
    %996 = vmatpush1.msra.mxu0 %v762
    %997 = vmatprep.subr.mxu0 0.0
    %998 = vmatpush1.msra.mxu0 %v763
    %999 = vmatprep.subr.mxu0 0.0
    %1000 = vmatpush1.msra.mxu0 %v764
    %1001 = vmatprep.subr.mxu0 0.0
    %1002 = vmatpush1.msra.mxu0 0.0
    %1003 = vmatprep.subr.mxu0 0.0
    %1004 = vmatpush1.msra.mxu0 0.0
    %1005 = vmatprep.subr.mxu0 0.0
    %1006 = vmatpush1.msra.mxu0 0.0
    %1007 = vmatprep.subr.mxu0 0.0
    %1008 = vmatpush1.msra.mxu0 0.0
    %1009 = vmatprep.subr.mxu0 0.0
    %1010 = vmatpush1.msra.mxu0 0.0
    %1011 = vmatprep.subr.mxu0 0.0
    %1012 = vmatpush1.msra.mxu0 0.0
    %1013 = vmatprep.subr.mxu0 0.0
    %1014 = vmatpush1.msra.mxu0 0.0
    %1015 = vmatprep.subr.mxu0 0.0
    %1016 = vmatpush1.msra.mxu0 0.0
    %1017 = vmatprep.subr.mxu0 0.0
    %1018 = vmatpush1.msra.mxu0 0.0
    %1019 = vmatprep.subr.mxu0 0.0
    %1020 = vmatpush1.msra.mxu0 0.0
    %1021 = vmatprep.subr.mxu0 0.0
    %1022 = vmatpush1.msra.mxu0 0.0
    %1023 = vmatprep.subr.mxu0 0.0
    %1024 = vmatpush1.msra.mxu0 0.0
    %1025 = vmatprep.subr.mxu0 0.0
    %1026 = vmatpush1.msra.mxu0 0.0
    %1027 = vmatprep.subr.mxu0 0.0
    %1028 = vmatpush1.msra.mxu0 0.0
    %1029 = vmatprep.subr.mxu0 0.0
    %1030 = vmatpush1.msra.mxu0 0.0
    %1031 = vmatprep.subr.mxu0 0.0
    %1032 = vmatpush1.msra.mxu0 0.0
    %1033 = vmatprep.subr.mxu0 0.0
    %1034 = vmatpush1.msra.mxu0 0.0
    %1035 = vmatprep.subr.mxu0 0.0
    %1036 = vmatpush1.msra.mxu0 0.0
    %1037 = vmatprep.subr.mxu0 0.0
    %1038 = vmatpush1.msra.mxu0 0.0
    %1039 = vmatprep.subr.mxu0 0.0
    %1040 = vmatpush1.msra.mxu0 0.0
    %1041 = vmatprep.subr.mxu0 0.0
    %1042 = vmatpush1.msra.mxu0 0.0
    %1043 = vmatprep.subr.mxu0 0.0
    %1044 = vmatpush1.msra.mxu0 0.0
    %1045 = vmatprep.subr.mxu0 0.0
    %1046 = vmatpush1.msra.mxu0 0.0
    %1047 = vmatprep.subr.mxu0 0.0
    %1048 = vmatpush1.msra.mxu0 0.0
    %1049 = vmatprep.subr.mxu0 0.0
    %1050 = vmatpush1.msra.mxu0 0.0
    %1051 = vmatprep.subr.mxu0 0.0
    %1052 = vmatpush1.msra.mxu0 0.0
    %1053 = vmatprep.subr.mxu0 0.0
    %1054 = vmatpush1.msra.mxu0 0.0
    %1055 = vmatprep.subr.mxu0 0.0
    %1056 = vmatpush1.msra.mxu0 0.0
    %1057 = vmatprep.mubr.f32.mxu0 0.0
    %1058 = vmatmul.mubr.f32.gmra.mrb[0].mxu0 %v991
    %v1059 = vpop.f32.mrb[0].mxu0
    %v1060 = vadd.f32 0.0, %v1059
    %v1061 = vpop.f32.mrb[0].mxu0
    %1062 = vdwg.mxu0
    %v1063 = vadd.f32 %v738, %v1060
    %v1064 = vtanh.pop %v1063
    %v1066 = vsel %vm483, %v1064, 0
    %1068 = vmatprep.subr.mxu0 0.0
    %1069 = vmatpush1.msra.mxu0 %v761
    %1070 = vmatprep.subr.mxu0 0.0
    %1071 = vmatpush1.msra.mxu0 %v762
    %1072 = vmatprep.subr.mxu0 0.0
    %1073 = vmatpush1.msra.mxu0 %v763
    %1074 = vmatprep.subr.mxu0 0.0
    %1075 = vmatpush1.msra.mxu0 %v764
    %1076 = vmatprep.subr.mxu0 0.0
    %1077 = vmatpush1.msra.mxu0 0.0
    %1078 = vmatprep.subr.mxu0 0.0
    %1079 = vmatpush1.msra.mxu0 0.0
    %1080 = vmatprep.subr.mxu0 0.0
    %1081 = vmatpush1.msra.mxu0 0.0
    %1082 = vmatprep.subr.mxu0 0.0
    %1083 = vmatpush1.msra.mxu0 0.0
    %1084 = vmatprep.subr.mxu0 0.0
    %1085 = vmatpush1.msra.mxu0 0.0
    %1086 = vmatprep.subr.mxu0 0.0
    %1087 = vmatpush1.msra.mxu0 0.0
    %1088 = vmatprep.subr.mxu0 0.0
    %1089 = vmatpush1.msra.mxu0 0.0
    %1090 = vmatprep.subr.mxu0 0.0
    %1091 = vmatpush1.msra.mxu0 0.0
    %1092 = vmatprep.subr.mxu0 0.0
    %1093 = vmatpush1.msra.mxu0 0.0
    %1094 = vmatprep.subr.mxu0 0.0
    %1095 = vmatpush1.msra.mxu0 0.0
    %1096 = vmatprep.subr.mxu0 0.0
    %1097 = vmatpush1.msra.mxu0 0.0
    %1098 = vmatprep.subr.mxu0 0.0
    %1099 = vmatpush1.msra.mxu0 0.0
    %1100 = vmatprep.subr.mxu0 0.0
    %1101 = vmatpush1.msra.mxu0 0.0
    %1102 = vmatprep.subr.mxu0 0.0
    %1103 = vmatpush1.msra.mxu0 0.0
    %1104 = vmatprep.subr.mxu0 0.0
    %1105 = vmatpush1.msra.mxu0 0.0
    %1106 = vmatprep.subr.mxu0 0.0
    %1107 = vmatpush1.msra.mxu0 0.0
    %1108 = vmatprep.subr.mxu0 0.0
    %1109 = vmatpush1.msra.mxu0 0.0
    %1110 = vmatprep.subr.mxu0 0.0
    %1111 = vmatpush1.msra.mxu0 0.0
    %1112 = vmatprep.subr.mxu0 0.0
    %1113 = vmatpush1.msra.mxu0 0.0
    %1114 = vmatprep.subr.mxu0 0.0
    %1115 = vmatpush1.msra.mxu0 0.0
    %1116 = vmatprep.subr.mxu0 0.0
    %1117 = vmatpush1.msra.mxu0 0.0
    %1118 = vmatprep.subr.mxu0 0.0
    %1119 = vmatpush1.msra.mxu0 0.0
    %1120 = vmatprep.subr.mxu0 0.0
    %1121 = vmatpush1.msra.mxu0 0.0
    %1122 = vmatprep.subr.mxu0 0.0
    %1123 = vmatpush1.msra.mxu0 0.0
    %1124 = vmatprep.subr.mxu0 0.0
    %1125 = vmatpush1.msra.mxu0 0.0
    %1126 = vmatprep.subr.mxu0 0.0
    %1127 = vmatpush1.msra.mxu0 0.0
    %1128 = vmatprep.subr.mxu0 0.0
    %1129 = vmatpush1.msra.mxu0 0.0
    %1130 = vmatprep.subr.mxu0 0.0
    %1131 = vmatpush1.msra.mxu0 0.0
    %1132 = vmatprep.mubr.f32.mxu0 0.0
    %1133 = vmatmul.mubr.f32.gmra.mrb[0].mxu0 %v1066
    %v1134 = vpop.f32.mrb[0].mxu0
    %v1135 = vadd.f32 0.0, %v1134
    %v1136 = vpop.f32.mrb[0].mxu0
    %1137 = vdwg.mxu0
    %v1138 = vadd.f32 %v743, %v1135
    %v1139 = vtanh.pop %v1138
    %v1141 = vsel %vm483, %v1139, 0
    %1143 = vmatprep.subr.mxu0 0.0
    %1144 = vmatpush1.msra.mxu0 %v761
    %1145 = vmatprep.subr.mxu0 0.0
    %1146 = vmatpush1.msra.mxu0 %v762
    %1147 = vmatprep.subr.mxu0 0.0
    %1148 = vmatpush1.msra.mxu0 %v763
    %1149 = vmatprep.subr.mxu0 0.0
    %1150 = vmatpush1.msra.mxu0 %v764
    %1151 = vmatprep.subr.mxu0 0.0
    %1152 = vmatpush1.msra.mxu0 0.0
    %1153 = vmatprep.subr.mxu0 0.0
    %1154 = vmatpush1.msra.mxu0 0.0
    %1155 = vmatprep.subr.mxu0 0.0
    %1156 = vmatpush1.msra.mxu0 0.0
    %1157 = vmatprep.subr.mxu0 0.0
    %1158 = vmatpush1.msra.mxu0 0.0
    %1159 = vmatprep.subr.mxu0 0.0
    %1160 = vmatpush1.msra.mxu0 0.0
    %1161 = vmatprep.subr.mxu0 0.0
    %1162 = vmatpush1.msra.mxu0 0.0
    %1163 = vmatprep.subr.mxu0 0.0
    %1164 = vmatpush1.msra.mxu0 0.0
    %1165 = vmatprep.subr.mxu0 0.0
    %1166 = vmatpush1.msra.mxu0 0.0
    %1167 = vmatprep.subr.mxu0 0.0
    %1168 = vmatpush1.msra.mxu0 0.0
    %1169 = vmatprep.subr.mxu0 0.0
    %1170 = vmatpush1.msra.mxu0 0.0
    %1171 = vmatprep.subr.mxu0 0.0
    %1172 = vmatpush1.msra.mxu0 0.0
    %1173 = vmatprep.subr.mxu0 0.0
    %1174 = vmatpush1.msra.mxu0 0.0
    %1175 = vmatprep.subr.mxu0 0.0
    %1176 = vmatpush1.msra.mxu0 0.0
    %1177 = vmatprep.subr.mxu0 0.0
    %1178 = vmatpush1.msra.mxu0 0.0
    %1179 = vmatprep.subr.mxu0 0.0
    %1180 = vmatpush1.msra.mxu0 0.0
    %1181 = vmatprep.subr.mxu0 0.0
    %1182 = vmatpush1.msra.mxu0 0.0
    %1183 = vmatprep.subr.mxu0 0.0
    %1184 = vmatpush1.msra.mxu0 0.0
    %1185 = vmatprep.subr.mxu0 0.0
    %1186 = vmatpush1.msra.mxu0 0.0
    %1187 = vmatprep.subr.mxu0 0.0
    %1188 = vmatpush1.msra.mxu0 0.0
    %1189 = vmatprep.subr.mxu0 0.0
    %1190 = vmatpush1.msra.mxu0 0.0
    %1191 = vmatprep.subr.mxu0 0.0
    %1192 = vmatpush1.msra.mxu0 0.0
    %1193 = vmatprep.subr.mxu0 0.0
    %1194 = vmatpush1.msra.mxu0 0.0
    %1195 = vmatprep.subr.mxu0 0.0
    %1196 = vmatpush1.msra.mxu0 0.0
    %1197 = vmatprep.subr.mxu0 0.0
    %1198 = vmatpush1.msra.mxu0 0.0
    %1199 = vmatprep.subr.mxu0 0.0
    %1200 = vmatpush1.msra.mxu0 0.0
    %1201 = vmatprep.subr.mxu0 0.0
    %1202 = vmatpush1.msra.mxu0 0.0
    %1203 = vmatprep.subr.mxu0 0.0
    %1204 = vmatpush1.msra.mxu0 0.0
    %1205 = vmatprep.subr.mxu0 0.0
    %1206 = vmatpush1.msra.mxu0 0.0
    %1207 = vmatprep.mubr.f32.mxu0 0.0
    %1208 = vmatmul.mubr.f32.gmra.mrb[0].mxu0 %v1141
    %v1209 = vpop.f32.mrb[0].mxu0
    %v1210 = vadd.f32 0.0, %v1209
    %v1211 = vpop.f32.mrb[0].mxu0
    %1212 = vdwg.mxu0
    %v1213 = vadd.f32 %v748, %v1210
    %v1214 = vtanh.pop %v1213
    %v1216 = vsel %vm483, %v1214, 0
    %1218 = vmatprep.subr.mxu0 0.0
    %1219 = vmatpush1.msra.mxu0 %v761
    %1220 = vmatprep.subr.mxu0 0.0
    %1221 = vmatpush1.msra.mxu0 %v762
    %1222 = vmatprep.subr.mxu0 0.0
    %1223 = vmatpush1.msra.mxu0 %v763
    %1224 = vmatprep.subr.mxu0 0.0
    %1225 = vmatpush1.msra.mxu0 %v764
    %1226 = vmatprep.subr.mxu0 0.0
    %1227 = vmatpush1.msra.mxu0 0.0
    %1228 = vmatprep.subr.mxu0 0.0
    %1229 = vmatpush1.msra.mxu0 0.0
    %1230 = vmatprep.subr.mxu0 0.0
    %1231 = vmatpush1.msra.mxu0 0.0
    %1232 = vmatprep.subr.mxu0 0.0
    %1233 = vmatpush1.msra.mxu0 0.0
    %1234 = vmatprep.subr.mxu0 0.0
    %1235 = vmatpush1.msra.mxu0 0.0
    %1236 = vmatprep.subr.mxu0 0.0
    %1237 = vmatpush1.msra.mxu0 0.0
    %1238 = vmatprep.subr.mxu0 0.0
    %1239 = vmatpush1.msra.mxu0 0.0
    %1240 = vmatprep.subr.mxu0 0.0
    %1241 = vmatpush1.msra.mxu0 0.0
    %1242 = vmatprep.subr.mxu0 0.0
    %1243 = vmatpush1.msra.mxu0 0.0
    %1244 = vmatprep.subr.mxu0 0.0
    %1245 = vmatpush1.msra.mxu0 0.0
    %1246 = vmatprep.subr.mxu0 0.0
    %1247 = vmatpush1.msra.mxu0 0.0
    %1248 = vmatprep.subr.mxu0 0.0
    %1249 = vmatpush1.msra.mxu0 0.0
    %1250 = vmatprep.subr.mxu0 0.0
    %1251 = vmatpush1.msra.mxu0 0.0
    %1252 = vmatprep.subr.mxu0 0.0
    %1253 = vmatpush1.msra.mxu0 0.0
    %1254 = vmatprep.subr.mxu0 0.0
    %1255 = vmatpush1.msra.mxu0 0.0
    %1256 = vmatprep.subr.mxu0 0.0
    %1257 = vmatpush1.msra.mxu0 0.0
    %1258 = vmatprep.subr.mxu0 0.0
    %1259 = vmatpush1.msra.mxu0 0.0
    %1260 = vmatprep.subr.mxu0 0.0
    %1261 = vmatpush1.msra.mxu0 0.0
    %1262 = vmatprep.subr.mxu0 0.0
    %1263 = vmatpush1.msra.mxu0 0.0
    %1264 = vmatprep.subr.mxu0 0.0
    %1265 = vmatpush1.msra.mxu0 0.0
    %1266 = vmatprep.subr.mxu0 0.0
    %1267 = vmatpush1.msra.mxu0 0.0
    %1268 = vmatprep.subr.mxu0 0.0
    %1269 = vmatpush1.msra.mxu0 0.0
    %1270 = vmatprep.subr.mxu0 0.0
    %1271 = vmatpush1.msra.mxu0 0.0
    %1272 = vmatprep.subr.mxu0 0.0
    %1273 = vmatpush1.msra.mxu0 0.0
    %1274 = vmatprep.subr.mxu0 0.0
    %1275 = vmatpush1.msra.mxu0 0.0
    %1276 = vmatprep.subr.mxu0 0.0
    %1277 = vmatpush1.msra.mxu0 0.0
    %1278 = vmatprep.subr.mxu0 0.0
    %1279 = vmatpush1.msra.mxu0 0.0
    %1280 = vmatprep.subr.mxu0 0.0
    %1281 = vmatpush1.msra.mxu0 0.0
    %1282 = vmatprep.mubr.f32.mxu0 0.0
    %1283 = vmatmul.mubr.f32.gmra.mrb[0].mxu0 %v1216
    %v1284 = vpop.f32.mrb[0].mxu0
    %v1285 = vadd.f32 0.0, %v1284
    %v1286 = vpop.f32.mrb[0].mxu0
    %1287 = vdwg.mxu0
    %v1288 = vadd.f32 %v753, %v1285
    %v1289 = vtanh.pop %v1288
    %v1291 = vsel %vm483, %v1289, 0
    %1293 = vmatprep.subr.mxu0 0.0
    %1294 = vmatpush1.msra.mxu0 %v761
    %1295 = vmatprep.subr.mxu0 0.0
    %1296 = vmatpush1.msra.mxu0 %v762
    %1297 = vmatprep.subr.mxu0 0.0
    %1298 = vmatpush1.msra.mxu0 %v763
    %1299 = vmatprep.subr.mxu0 0.0
    %1300 = vmatpush1.msra.mxu0 %v764
    %1301 = vmatprep.subr.mxu0 0.0
    %1302 = vmatpush1.msra.mxu0 0.0
    %1303 = vmatprep.subr.mxu0 0.0
    %1304 = vmatpush1.msra.mxu0 0.0
    %1305 = vmatprep.subr.mxu0 0.0
    %1306 = vmatpush1.msra.mxu0 0.0
    %1307 = vmatprep.subr.mxu0 0.0
    %1308 = vmatpush1.msra.mxu0 0.0
    %1309 = vmatprep.subr.mxu0 0.0
    %1310 = vmatpush1.msra.mxu0 0.0
    %1311 = vmatprep.subr.mxu0 0.0
    %1312 = vmatpush1.msra.mxu0 0.0
    %1313 = vmatprep.subr.mxu0 0.0
    %1314 = vmatpush1.msra.mxu0 0.0
    %1315 = vmatprep.subr.mxu0 0.0
    %1316 = vmatpush1.msra.mxu0 0.0
    %1317 = vmatprep.subr.mxu0 0.0
    %1318 = vmatpush1.msra.mxu0 0.0
    %1319 = vmatprep.subr.mxu0 0.0
    %1320 = vmatpush1.msra.mxu0 0.0
    %1321 = vmatprep.subr.mxu0 0.0
    %1322 = vmatpush1.msra.mxu0 0.0
    %1323 = vmatprep.subr.mxu0 0.0
    %1324 = vmatpush1.msra.mxu0 0.0
    %1325 = vmatprep.subr.mxu0 0.0
    %1326 = vmatpush1.msra.mxu0 0.0
    %1327 = vmatprep.subr.mxu0 0.0
    %1328 = vmatpush1.msra.mxu0 0.0
    %1329 = vmatprep.subr.mxu0 0.0
    %1330 = vmatpush1.msra.mxu0 0.0
    %1331 = vmatprep.subr.mxu0 0.0
    %1332 = vmatpush1.msra.mxu0 0.0
    %1333 = vmatprep.subr.mxu0 0.0
    %1334 = vmatpush1.msra.mxu0 0.0
    %1335 = vmatprep.subr.mxu0 0.0
    %1336 = vmatpush1.msra.mxu0 0.0
    %1337 = vmatprep.subr.mxu0 0.0
    %1338 = vmatpush1.msra.mxu0 0.0
    %1339 = vmatprep.subr.mxu0 0.0
    %1340 = vmatpush1.msra.mxu0 0.0
    %1341 = vmatprep.subr.mxu0 0.0
    %1342 = vmatpush1.msra.mxu0 0.0
    %1343 = vmatprep.subr.mxu0 0.0
    %1344 = vmatpush1.msra.mxu0 0.0
    %1345 = vmatprep.subr.mxu0 0.0
    %1346 = vmatpush1.msra.mxu0 0.0
    %1347 = vmatprep.subr.mxu0 0.0
    %1348 = vmatpush1.msra.mxu0 0.0
    %1349 = vmatprep.subr.mxu0 0.0
    %1350 = vmatpush1.msra.mxu0 0.0
    %1351 = vmatprep.subr.mxu0 0.0
    %1352 = vmatpush1.msra.mxu0 0.0
    %1353 = vmatprep.subr.mxu0 0.0
    %1354 = vmatpush1.msra.mxu0 0.0
    %1355 = vmatprep.subr.mxu0 0.0
    %1356 = vmatpush1.msra.mxu0 0.0
    %1357 = vmatprep.mubr.f32.mxu0 0.0
    %1358 = vmatmul.mubr.f32.gmra.mrb[0].mxu0 %v1291
    %v1359 = vpop.f32.mrb[0].mxu0
    %v1360 = vadd.f32 0.0, %v1359
    %v1361 = vpop.f32.mrb[0].mxu0
    %1362 = vdwg.mxu0
    %v1363 = vadd.f32 %v758, %v1360
    %v1364 = vtanh.pop %v1363
    %1365 = vst.msk [vmem:[#allocation8] sm:$0xff] %vm483, %v839
    %1366 = vst.msk [vmem:[#allocation8 + $0x8] sm:$0xff] %vm483, %v914
    %1367 = vst.msk [vmem:[#allocation8 + $0x10] sm:$0xff] %vm483, %v989
    %1368 = vst.msk [vmem:[#allocation8 + $0x18] sm:$0xff] %vm483, %v1064
    %1369 = vst.msk [vmem:[#allocation8 + $0x20] sm:$0xff] %vm483, %v1139
    %1370 = vst.msk [vmem:[#allocation8 + $0x28] sm:$0xff] %vm483, %v1214
    %1371 = vst.msk [vmem:[#allocation8 + $0x30] sm:$0xff] %vm483, %v1289
    %1372 = vst.msk [vmem:[#allocation8 + $0x38] sm:$0xff] %vm483, %v1364
    // Predicated region
    $region50: #{tpu_custom_call.1} parent=1 // pred_check
      _
    $region51: #{tpu_custom_call.1} parent=1 // pred_check_branch
      %1374 = sbr.rel (0) target = $region53
    $region52: #{tpu_custom_call.1} parent=1 // pred_region
      %s1376 = ssub.s32 1024, 1024
      %1377 = vsyncadd [#allocation4], %s1376
      %s1378 = sshll.u32 [#allocation8], 4
      %s1379 = int_to_ptr.vmem [resolvable:$true] %s1378
      %1384 = dma.vmem_to_hbm [thread:$0]  %s1379, 1024, %s9, [#allocation4], 128, 128, 8
    $region53: #{tpu_custom_call.1} parent=1 // pred_fallthru
      _
    // Predicated region
    $region54: #{tpu_custom_call.1} parent=1 // pred_check
      _
    $region55: #{tpu_custom_call.1} parent=1 // pred_check_branch
      %1386 = sbr.rel (0) target = $region57
    $region56: #{tpu_custom_call.1} parent=1 // pred_region
      %1387 = dma.done [#allocation4], 1024
    $region57: #{tpu_custom_call.1} parent=1 // pred_fallthru
      _
    %1388 = vsyncpa [#allocation3], 1
    %1389 = vsyncpa [#allocation6], 1
    %1390 = vsyncpa [#allocation4], 1

</llo_original>
